<compile_context>
chip_gen: v5e
topology: v5e:2x2
jax: 0.10.0
libtpu: 0.0.40
codegen_flags: <defaults>
</compile_context>

<pallas_src>
import math
import functools

import jax
import jax.numpy as jnp
from jax.experimental import pallas as pl
from jax.experimental.pallas import tpu as pltpu

EPS = 1e-5


def _masked_instance_norm(y, m):
    """Per-sample, per-channel normalization over valid rows (single fused pass:
    var = E[y^2] - mu^2, clamped)."""
    n = jnp.maximum(jnp.sum(m, axis=0, keepdims=True), 1.0)          # (1, 1)
    inv_n = 1.0 / n
    ym = y * m
    mu = jnp.sum(ym, axis=0, keepdims=True) * inv_n                  # (1, C)
    ey2 = jnp.sum(ym * y, axis=0, keepdims=True) * inv_n             # (1, C)
    var = jnp.maximum(ey2 - mu * mu, 0.0)
    return (y - mu) * jax.lax.rsqrt(var + EPS) * m


def _fusion_neck_kernel(n_heads,
                        vid_ref, vmask_ref, text_ref, tmcol_ref, tmrow_ref,
                        wq_ref, wk_ref, wv_ref, wconv_ref, bconv_ref,
                        out_ref, x_sc):
    f32, bf16 = jnp.float32, jnp.bfloat16
    layer = pl.program_id(1)
    n_layers = pl.num_programs(1)

    # Running video features: fresh from the input block at layer 0, otherwise the
    # carry produced by the previous layer (lives in VMEM scratch; no HBM trip).
    @pl.when(layer == 0)
    def _():
        x_sc[...] = vid_ref[0]

    x = x_sc[...]                 # (T, C) f32
    vm = vmask_ref[0]             # (T, 1) f32
    s = text_ref[0]               # (S, C) f32
    tm_col = tmcol_ref[0]         # (S, 1)
    tm_row = tmrow_ref[0]         # (1, S)

    T, C = x.shape
    H = n_heads
    Dh = C // H
    scale = 1.0 / math.sqrt(Dh)

    # Text (style) branch: tiny (S rows) -> recomputed per layer instead of cached.
    sn_bf = _masked_instance_norm(s, tm_col).astype(bf16)             # (S, C)
    s_bf = s.astype(bf16)
    key_bias = jnp.where(tm_row > 0.0, 0.0, -1e30)[None]              # (1, 1, S)

    # ----------------- MaskedAdaAttN (all heads batched) -----------------
    xn = _masked_instance_norm(x, vm)                                 # (T, C) f32
    xn_bf = xn.astype(bf16)

    # Per-head projections with head-split weights (no lane-slicing of activations),
    # stacked so attention runs as batched dot_generals with a single softmax.
    qh = jnp.stack([jnp.dot(xn_bf, wq_ref[0, h], preferred_element_type=f32)
                    for h in range(H)], axis=0).astype(bf16)          # (H, T, Dh)
    kh = jnp.stack([jnp.dot(sn_bf, wk_ref[0, h], preferred_element_type=f32)
                    for h in range(H)], axis=0).astype(bf16)          # (H, S, Dh)
    vh = jnp.stack([jnp.dot(s_bf, wv_ref[0, h], preferred_element_type=f32)
                    for h in range(H)], axis=0)                       # (H, S, Dh) f32

    logits = jnp.einsum('htd,hsd->hts', qh, kh,
                        preferred_element_type=f32) * scale + key_bias  # (H, T, S)
    logits = logits - jnp.max(logits, axis=-1, keepdims=True)
    e = jnp.exp(logits)
    attn = e * pl.reciprocal(jnp.sum(e, axis=-1, keepdims=True), approx=True)

    # E[v] and E[v^2] in f32 (S is tiny; keeps std = sqrt(E[v^2]-E[v]^2) stable).
    ev = jnp.einsum('hts,hsd->htd', attn, vh, preferred_element_type=f32)       # (H,T,Dh)
    ev2 = jnp.einsum('hts,hsd->htd', attn, vh * vh, preferred_element_type=f32)

    # ONE lane-dense concat per statistic (no per-head 32-lane partial stores).
    mean = jnp.concatenate([ev[h] for h in range(H)], axis=-1)        # (T, C)
    m2 = jnp.concatenate([ev2[h] for h in range(H)], axis=-1)         # (T, C)
    std = jnp.sqrt(jnp.maximum(m2 - mean * mean, 0.0) + EPS)
    # Mask the AdaAttN output (required: the conv below reads neighbours).
    ada = (std * xn + mean) * vm                                      # (T, C) f32

    # -------- MaskedConv1D(k=3, stride=1, pad=1) as ONE (T,3C)x(3C,C) matmul --------
    ridx = jax.lax.broadcasted_iota(jnp.int32, (T, 1), 0)
    # rolls kept in f32 (known-good lowering); concat + matmul input are bf16
    x_m1 = jnp.where(ridx > 0, pltpu.roll(ada, 1, axis=0), 0.0).astype(bf16)     # ada[t-1]
    x_p1 = jnp.where(ridx < T - 1, pltpu.roll(ada, T - 1, axis=0), 0.0).astype(bf16)  # ada[t+1]
    xcat = jnp.concatenate([x_m1, ada.astype(bf16), x_p1], axis=-1)   # (T, 3C) bf16
    new_x = jnp.dot(xcat, wconv_ref[0], preferred_element_type=f32) + bconv_ref[0]

    # Carry for the next layer; padded/invalid rows are ignored by the next layer's
    # masked instance-norm and re-zeroed by the masked AdaAttN output.
    x_sc[...] = new_x

    @pl.when(layer == n_layers - 1)
    def _():
        out_ref[0] = new_x * vm


def _run_fusion_levels(vid_all, vm_all, text_all, tmcol_all, tmrow_all,
                       params, n_heads, n_layers):
    """All levels (stacked along batch) x all layers in a single pallas_call."""
    NB, Tp, C = vid_all.shape
    S = text_all.shape[1]
    H = n_heads
    Dh = C // H
    L = n_layers
    kern = functools.partial(_fusion_neck_kernel, n_heads)
    return pl.pallas_call(
        kern,
        out_shape=jax.ShapeDtypeStruct((NB, Tp, C), jnp.float32),
        grid_spec=pltpu.PrefetchScalarGridSpec(
            num_scalar_prefetch=0,
            grid=(NB, L),                                   # layers innermost (carried)
            in_specs=[
                pl.BlockSpec((1, Tp, C), lambda n, l: (n, 0, 0)),        # vid
                pl.BlockSpec((1, Tp, 1), lambda n, l: (n, 0, 0)),        # vid mask
                pl.BlockSpec((1, S, C), lambda n, l: (n, 0, 0)),         # text
                pl.BlockSpec((1, S, 1), lambda n, l: (n, 0, 0)),         # text mask (col)
                pl.BlockSpec((1, 1, S), lambda n, l: (n, 0, 0)),         # text mask (row)
                pl.BlockSpec((1, H, C, Dh), lambda n, l: (l, 0, 0, 0)),  # Wq (head-split)
                pl.BlockSpec((1, H, C, Dh), lambda n, l: (l, 0, 0, 0)),  # Wk
                pl.BlockSpec((1, H, C, Dh), lambda n, l: (l, 0, 0, 0)),  # Wv
                pl.BlockSpec((1, 3 * C, C), lambda n, l: (l, 0, 0)),     # packed conv taps
                pl.BlockSpec((1, 1, C), lambda n, l: (l, 0, 0)),         # conv bias (f32)
            ],
            out_specs=pl.BlockSpec((1, Tp, C), lambda n, l: (n, 0, 0)),
            scratch_shapes=[pltpu.VMEM((Tp, C), jnp.float32)],           # running x carry
        ),
        compiler_params=pltpu.CompilerParams(
            # batch/level axis shards across cores on v7x megacore; L is sequential.
            dimension_semantics=("parallel", "arbitrary"),
        ),
    )(vid_all, vm_all, text_all, tmcol_all, tmrow_all,
      params["wq_h"], params["wk_h"], params["wv_h"],
      params["wconv_t"], params["bconv"])


def init_fusion_neck_params(key, embd_dim, n_layers, n_heads):
    """Deterministic synthetic weights, stacked over layers and split per head.
    PyTorch shapes: Conv1d(C,C,1) for q/k/v, Conv1d(C,C,3) for MaskedConv1D;
    all biases zero per __init_weights__. Matmul weights stored in bf16."""
    C = embd_dim
    H = n_heads
    Dh = C // H

    def split_heads(w):                      # (C_out, C_in) -> (H, C_in, Dh)
        return jnp.transpose(w.T.reshape(C, H, Dh), (1, 0, 2))

    wq_l, wk_l, wv_l, wc_l, bc_l = [], [], [], [], []
    for _ in range(n_layers):
        key, k1, k2, k3, k4 = jax.random.split(key, 5)
        wq = jax.random.normal(k1, (C, C), jnp.float32) * 0.02           # (C_out, C_in)
        wk = jax.random.normal(k2, (C, C), jnp.float32) * 0.02
        wv = jax.random.normal(k3, (C, C), jnp.float32) * 0.02
        wconv = jax.random.normal(k4, (C, C, 3), jnp.float32) * 0.02     # (C_out, C_in, 3)
        wq_l.append(split_heads(wq))
        wk_l.append(split_heads(wk))
        wv_l.append(split_heads(wv))
        # pack taps as rows [x[t-1] | x[t] | x[t+1]] -> (3*C_in, C_out)
        wc_l.append(jnp.concatenate([wconv[:, :, j].T for j in range(3)], axis=0))
        bc_l.append(jnp.zeros((1, C), jnp.float32))
    return {
        "wq_h": jnp.stack(wq_l).astype(jnp.bfloat16),      # (L, H, C, Dh)
        "wk_h": jnp.stack(wk_l).astype(jnp.bfloat16),
        "wv_h": jnp.stack(wv_l).astype(jnp.bfloat16),
        "wconv_t": jnp.stack(wc_l).astype(jnp.bfloat16),   # (L, 3C, C)
        "bconv": jnp.stack(bc_l),                          # (L, 1, C) f32
    }


def fusion_neck_forward(params, fpn_vid, fpn_vid_masks, text, text_mask,
                        n_heads=4, n_layers=2):
    """Mirrors FusionNeck.forward (eval mode).
    PyTorch-layout inputs: fpn_vid[l] (B, C, T_l), fpn_vid_masks[l] (B, 1, T_l) bool,
    text (B, C, S), text_mask (B, 1, S) bool."""
    # The sinusoidal PE add in the original forward is guarded by `and False`
    # and the transformer blocks are never called -> not applied here.
    n_levels = len(fpn_vid)
    B = fpn_vid[0].shape[0]

    text_t = jnp.transpose(text, (0, 2, 1)).astype(jnp.float32)           # (B, S, C)
    tmask_col = jnp.transpose(text_mask, (0, 2, 1)).astype(jnp.float32)   # (B, S, 1)
    tmask_row = text_mask.astype(jnp.float32)                             # (B, 1, S)

    # Pad every level to a common (8-aligned) T and stack along batch so all levels,
    # all batch elements and all layers run in ONE pallas_call (overhead paid once).
    Ts = [int(v.shape[-1]) for v in fpn_vid]
    Tp = ((max(Ts) + 7) // 8) * 8

    vids, vms = [], []
    for vid, vmask in zip(fpn_vid, fpn_vid_masks):
        v = jnp.transpose(vid, (0, 2, 1)).astype(jnp.float32)             # (B, T, C)
        m = jnp.transpose(vmask, (0, 2, 1)).astype(jnp.float32)           # (B, T, 1)
        pad = Tp - v.shape[1]
        vids.append(jnp.pad(v, ((0, 0), (0, pad), (0, 0))))
        vms.append(jnp.pad(m, ((0, 0), (0, pad), (0, 0))))
    vid_all = jnp.concatenate(vids, axis=0)                                # (n_lvl*B, Tp, C)
    vm_all = jnp.concatenate(vms, axis=0)
    text_all = jnp.tile(text_t, (n_levels, 1, 1))
    tmcol_all = jnp.tile(tmask_col, (n_levels, 1, 1))
    tmrow_all = jnp.tile(tmask_row, (n_levels, 1, 1))

    out_all = _run_fusion_levels(vid_all, vm_all, text_all, tmcol_all, tmrow_all,
                                 params, n_heads, n_layers)

    out_feats, out_masks = (), ()
    for i, (t, vmask) in enumerate(zip(Ts, fpn_vid_masks)):
        o = out_all[i * B:(i + 1) * B, :t, :]                              # (B, T_l, C)
        out_feats += (jnp.transpose(o, (0, 2, 1)),)                        # back to (B, C, T_l)
        out_masks += (vmask,)                                              # mask unchanged (stride=1)
    return out_feats, out_masks


def _make_mask(lengths, t):
    idx = jnp.arange(t)[None, :]
    return (idx < jnp.asarray(lengths)[:, None])[:, None, :]   # (B, 1, T) bool


if __name__ == "__main__":
    B, C, S = 2, 128, 8          # C = 128 -> lane-dense channel dimension
    n_fpn_levels, n_layers, n_heads = 2, 2, 4
    Ts = [16, 8]

    key = jax.random.PRNGKey(0)
    key, kp, kt = jax.random.split(key, 3)
    params = init_fusion_neck_params(kp, C, n_layers, n_heads)

    fpn_vid, fpn_vid_masks = [], []
    vid_lengths = [[16, 12], [8, 6]]
    for lvl, t in enumerate(Ts):
        key, kv = jax.random.split(key)
        fpn_vid.append(jax.random.normal(kv, (B, C, t), jnp.float32))
        fpn_vid_masks.append(_make_mask(vid_lengths[lvl], t))

    text = jax.random.normal(kt, (B, C, S), jnp.float32)
    text_mask = _make_mask([8, 5], S)

    out_feats, out_masks = fusion_neck_forward(
        params, fpn_vid, fpn_vid_masks, text, text_mask,
        n_heads=n_heads, n_layers=n_layers)

    for f in out_feats:
        jax.block_until_ready(f)
    print("KERNEL_OK")
</pallas_src>

<mosaic_0001>
module attributes {stable_mosaic.version = 11 : i64} {
  func.func @_fusion_neck_kernel(%arg0: i32, %arg1: i32, %arg2: memref<1x16x128xf32, #tpu.memory_space<vmem>>, %arg3: memref<1x16x1xf32, #tpu.memory_space<vmem>>, %arg4: memref<1x8x128xf32, #tpu.memory_space<vmem>>, %arg5: memref<1x8x1xf32, #tpu.memory_space<vmem>>, %arg6: memref<1x1x8xf32, #tpu.memory_space<vmem>>, %arg7: memref<1x4x128x32xbf16, #tpu.memory_space<vmem>>, %arg8: memref<1x4x128x32xbf16, #tpu.memory_space<vmem>>, %arg9: memref<1x4x128x32xbf16, #tpu.memory_space<vmem>>, %arg10: memref<1x384x128xbf16, #tpu.memory_space<vmem>>, %arg11: memref<1x1x128xf32, #tpu.memory_space<vmem>>, %arg12: memref<1x16x128xf32, #tpu.memory_space<vmem>>, %arg13: memref<16x128xf32, #tpu.memory_space<vmem>>) attributes {dimension_semantics = [#tpu.dimension_semantics<parallel>, #tpu.dimension_semantics<arbitrary>], iteration_bounds = array<i64: 4, 2>, scalar_prefetch = 0 : i64, scratch_operands = 1 : i64, tpu.core_type = #tpu.core_type<tc>, window_params = [{transform_indices = @transform_0, window_bounds = array<i64: 1, 16, 128>}, {transform_indices = @transform_1, window_bounds = array<i64: 1, 16, 1>}, {transform_indices = @transform_2, window_bounds = array<i64: 1, 8, 128>}, {transform_indices = @transform_3, window_bounds = array<i64: 1, 8, 1>}, {transform_indices = @transform_4, window_bounds = array<i64: 1, 1, 8>}, {transform_indices = @transform_5, window_bounds = array<i64: 1, 4, 128, 32>}, {transform_indices = @transform_6, window_bounds = array<i64: 1, 4, 128, 32>}, {transform_indices = @transform_7, window_bounds = array<i64: 1, 4, 128, 32>}, {transform_indices = @transform_8, window_bounds = array<i64: 1, 384, 128>}, {transform_indices = @transform_9, window_bounds = array<i64: 1, 1, 128>}, {transform_indices = @transform_10, window_bounds = array<i64: 1, 16, 128>}]} {
    %c0_i32 = arith.constant 0 : i32
    %0 = arith.cmpi eq, %arg1, %c0_i32 : i32
    %1 = arith.extui %0 : i1 to i32
    %c0_i32_0 = arith.constant 0 : i32
    %2 = arith.cmpi ne, %1, %c0_i32_0 : i32
    scf.if %2 {
      %c0_110 = arith.constant 0 : index
      %c0_111 = arith.constant 0 : index
      %c0_112 = arith.constant 0 : index
      %211 = vector.load %arg2[%c0_110, %c0_111, %c0_112] : memref<1x16x128xf32, #tpu.memory_space<vmem>>, vector<1x16x128xf32>
      %212 = vector.shape_cast %211 : vector<1x16x128xf32> to vector<16x128xf32>
      %c0_113 = arith.constant 0 : index
      %c0_114 = arith.constant 0 : index
      %213 = vector.load %arg13[%c0_113, %c0_114] : memref<16x128xf32, #tpu.memory_space<vmem>>, vector<16x128xf32>
      tpu.vector_store %arg13[%c0_113, %c0_114], %212 {strides = array<i32>} : memref<16x128xf32, #tpu.memory_space<vmem>>, vector<16x128xf32>,
    } else {
    }
    %c0 = arith.constant 0 : index
    %c0_1 = arith.constant 0 : index
    %3 = vector.load %arg13[%c0, %c0_1] : memref<16x128xf32, #tpu.memory_space<vmem>>, vector<16x128xf32>
    %c0_2 = arith.constant 0 : index
    %c0_3 = arith.constant 0 : index
    %c0_4 = arith.constant 0 : index
    %4 = vector.load %arg3[%c0_2, %c0_3, %c0_4] : memref<1x16x1xf32, #tpu.memory_space<vmem>>, vector<1x16x1xf32>
    %5 = vector.shape_cast %4 : vector<1x16x1xf32> to vector<16x1xf32>
    %c0_5 = arith.constant 0 : index
    %c0_6 = arith.constant 0 : index
    %c0_7 = arith.constant 0 : index
    %6 = vector.load %arg4[%c0_5, %c0_6, %c0_7] : memref<1x8x128xf32, #tpu.memory_space<vmem>>, vector<1x8x128xf32>
    %7 = vector.shape_cast %6 : vector<1x8x128xf32> to vector<8x128xf32>
    %c0_8 = arith.constant 0 : index
    %c0_9 = arith.constant 0 : index
    %c0_10 = arith.constant 0 : index
    %8 = vector.load %arg5[%c0_8, %c0_9, %c0_10] : memref<1x8x1xf32, #tpu.memory_space<vmem>>, vector<1x8x1xf32>
    %9 = vector.shape_cast %8 : vector<1x8x1xf32> to vector<8x1xf32>
    %c0_11 = arith.constant 0 : index
    %c0_12 = arith.constant 0 : index
    %c0_13 = arith.constant 0 : index
    %10 = vector.load %arg6[%c0_11, %c0_12, %c0_13] : memref<1x1x8xf32, #tpu.memory_space<vmem>>, vector<1x1x8xf32>
    %11 = vector.shape_cast %10 : vector<1x1x8xf32> to vector<1x8xf32>
    %cst = arith.constant dense<0.000000e+00> : vector<1xf32>
    %12 = vector.multi_reduction <add>, %9, %cst [0] : vector<8x1xf32> to vector<1xf32>
    %13 = vector.shape_cast %12 : vector<1xf32> to vector<1x1xf32>
    %cst_14 = arith.constant 1.000000e+00 : f32
    %14 = vector.broadcast %cst_14 : f32 to vector<1x1xf32>
    %15 = arith.maximumf %13, %14 : vector<1x1xf32>
    %cst_15 = arith.constant 1.000000e+00 : f32
    %16 = vector.broadcast %cst_15 : f32 to vector<1x1xf32>
    %17 = arith.divf %16, %15 : vector<1x1xf32>
    %18 = vector.broadcast %9 : vector<8x1xf32> to vector<8x128xf32>
    %19 = arith.mulf %7, %18 : vector<8x128xf32>
    %cst_16 = arith.constant dense<0.000000e+00> : vector<128xf32>
    %20 = vector.multi_reduction <add>, %19, %cst_16 [0] : vector<8x128xf32> to vector<128xf32>
    %21 = vector.shape_cast %20 : vector<128xf32> to vector<1x128xf32>
    %22 = vector.broadcast %17 : vector<1x1xf32> to vector<1x128xf32>
    %23 = arith.mulf %21, %22 : vector<1x128xf32>
    %24 = arith.mulf %19, %7 : vector<8x128xf32>
    %cst_17 = arith.constant dense<0.000000e+00> : vector<128xf32>
    %25 = vector.multi_reduction <add>, %24, %cst_17 [0] : vector<8x128xf32> to vector<128xf32>
    %26 = vector.shape_cast %25 : vector<128xf32> to vector<1x128xf32>
    %27 = vector.broadcast %17 : vector<1x1xf32> to vector<1x128xf32>
    %28 = arith.mulf %26, %27 : vector<1x128xf32>
    %29 = arith.mulf %23, %23 : vector<1x128xf32>
    %30 = arith.subf %28, %29 : vector<1x128xf32>
    %cst_18 = arith.constant 0.000000e+00 : f32
    %31 = vector.broadcast %cst_18 : f32 to vector<1x128xf32>
    %32 = arith.maximumf %30, %31 : vector<1x128xf32>
    %33 = vector.broadcast %23 : vector<1x128xf32> to vector<8x128xf32>
    %34 = arith.subf %7, %33 : vector<8x128xf32>
    %cst_19 = arith.constant 9.99999974E-6 : f32
    %35 = vector.broadcast %cst_19 : f32 to vector<1x128xf32>
    %36 = arith.addf %32, %35 : vector<1x128xf32>
    %37 = math.rsqrt %36 : vector<1x128xf32>
    %38 = vector.broadcast %37 : vector<1x128xf32> to vector<8x128xf32>
    %39 = arith.mulf %34, %38 : vector<8x128xf32>
    %40 = vector.broadcast %9 : vector<8x1xf32> to vector<8x128xf32>
    %41 = arith.mulf %39, %40 : vector<8x128xf32>
    %42 = arith.truncf %41 : vector<8x128xf32> to vector<8x128xbf16>
    %43 = arith.truncf %7 : vector<8x128xf32> to vector<8x128xbf16>
    %cst_20 = arith.constant 0.000000e+00 : f32
    %44 = vector.broadcast %cst_20 : f32 to vector<1x8xf32>
    %45 = arith.cmpf ogt, %11, %44 : vector<1x8xf32>
    %cst_21 = arith.constant 0.000000e+00 : f32
    %cst_22 = arith.constant -1.000000e+30 : f32
    %46 = vector.broadcast %cst_21 : f32 to vector<1x8xf32>
    %47 = vector.broadcast %cst_22 : f32 to vector<1x8xf32>
    %48 = arith.select %45, %46, %47 : vector<1x8xi1>, vector<1x8xf32>
    %49 = vector.shape_cast %48 : vector<1x8xf32> to vector<1x1x8xf32>
    %cst_23 = arith.constant dense<0.000000e+00> : vector<1xf32>
    %50 = vector.multi_reduction <add>, %5, %cst_23 [0] : vector<16x1xf32> to vector<1xf32>
    %51 = vector.shape_cast %50 : vector<1xf32> to vector<1x1xf32>
    %cst_24 = arith.constant 1.000000e+00 : f32
    %52 = vector.broadcast %cst_24 : f32 to vector<1x1xf32>
    %53 = arith.maximumf %51, %52 : vector<1x1xf32>
    %cst_25 = arith.constant 1.000000e+00 : f32
    %54 = vector.broadcast %cst_25 : f32 to vector<1x1xf32>
    %55 = arith.divf %54, %53 : vector<1x1xf32>
    %56 = vector.broadcast %5 : vector<16x1xf32> to vector<16x128xf32>
    %57 = arith.mulf %3, %56 : vector<16x128xf32>
    %cst_26 = arith.constant dense<0.000000e+00> : vector<128xf32>
    %58 = vector.multi_reduction <add>, %57, %cst_26 [0] : vector<16x128xf32> to vector<128xf32>
    %59 = vector.shape_cast %58 : vector<128xf32> to vector<1x128xf32>
    %60 = vector.broadcast %55 : vector<1x1xf32> to vector<1x128xf32>
    %61 = arith.mulf %59, %60 : vector<1x128xf32>
    %62 = arith.mulf %57, %3 : vector<16x128xf32>
    %cst_27 = arith.constant dense<0.000000e+00> : vector<128xf32>
    %63 = vector.multi_reduction <add>, %62, %cst_27 [0] : vector<16x128xf32> to vector<128xf32>
    %64 = vector.shape_cast %63 : vector<128xf32> to vector<1x128xf32>
    %65 = vector.broadcast %55 : vector<1x1xf32> to vector<1x128xf32>
    %66 = arith.mulf %64, %65 : vector<1x128xf32>
    %67 = arith.mulf %61, %61 : vector<1x128xf32>
    %68 = arith.subf %66, %67 : vector<1x128xf32>
    %cst_28 = arith.constant 0.000000e+00 : f32
    %69 = vector.broadcast %cst_28 : f32 to vector<1x128xf32>
    %70 = arith.maximumf %68, %69 : vector<1x128xf32>
    %71 = vector.broadcast %61 : vector<1x128xf32> to vector<16x128xf32>
    %72 = arith.subf %3, %71 : vector<16x128xf32>
    %cst_29 = arith.constant 9.99999974E-6 : f32
    %73 = vector.broadcast %cst_29 : f32 to vector<1x128xf32>
    %74 = arith.addf %70, %73 : vector<1x128xf32>
    %75 = math.rsqrt %74 : vector<1x128xf32>
    %76 = vector.broadcast %75 : vector<1x128xf32> to vector<16x128xf32>
    %77 = arith.mulf %72, %76 : vector<16x128xf32>
    %78 = vector.broadcast %5 : vector<16x1xf32> to vector<16x128xf32>
    %79 = arith.mulf %77, %78 : vector<16x128xf32>
    %80 = arith.truncf %79 : vector<16x128xf32> to vector<16x128xbf16>
    %c0_30 = arith.constant 0 : index
    %c0_31 = arith.constant 0 : index
    %c0_32 = arith.constant 0 : index
    %c0_33 = arith.constant 0 : index
    %81 = vector.load %arg7[%c0_30, %c0_31, %c0_32, %c0_33] : memref<1x4x128x32xbf16, #tpu.memory_space<vmem>>, vector<1x1x128x32xbf16>
    %82 = vector.shape_cast %81 : vector<1x1x128x32xbf16> to vector<128x32xbf16>
    %cst_34 = arith.constant dense<0.000000e+00> : vector<16x32xf32>
    %83 = tpu.matmul %80, %82, %cst_34 {dimension_numbers = #tpu.dot_dimension_numbers<[1], [0], [0], [1], [0, 0, 1, 1], [], []>} : vector<16x128xbf16>, vector<128x32xbf16>, vector<16x32xf32> -> vector<16x32xf32>
    %c0_35 = arith.constant 0 : index
    %c1 = arith.constant 1 : index
    %c0_36 = arith.constant 0 : index
    %c0_37 = arith.constant 0 : index
    %84 = vector.load %arg7[%c0_35, %c1, %c0_36, %c0_37] : memref<1x4x128x32xbf16, #tpu.memory_space<vmem>>, vector<1x1x128x32xbf16>
    %85 = vector.shape_cast %84 : vector<1x1x128x32xbf16> to vector<128x32xbf16>
    %cst_38 = arith.constant dense<0.000000e+00> : vector<16x32xf32>
    %86 = tpu.matmul %80, %85, %cst_38 {dimension_numbers = #tpu.dot_dimension_numbers<[1], [0], [0], [1], [0, 0, 1, 1], [], []>} : vector<16x128xbf16>, vector<128x32xbf16>, vector<16x32xf32> -> vector<16x32xf32>
    %c0_39 = arith.constant 0 : index
    %c2 = arith.constant 2 : index
    %c0_40 = arith.constant 0 : index
    %c0_41 = arith.constant 0 : index
    %87 = vector.load %arg7[%c0_39, %c2, %c0_40, %c0_41] : memref<1x4x128x32xbf16, #tpu.memory_space<vmem>>, vector<1x1x128x32xbf16>
    %88 = vector.shape_cast %87 : vector<1x1x128x32xbf16> to vector<128x32xbf16>
    %cst_42 = arith.constant dense<0.000000e+00> : vector<16x32xf32>
    %89 = tpu.matmul %80, %88, %cst_42 {dimension_numbers = #tpu.dot_dimension_numbers<[1], [0], [0], [1], [0, 0, 1, 1], [], []>} : vector<16x128xbf16>, vector<128x32xbf16>, vector<16x32xf32> -> vector<16x32xf32>
    %c0_43 = arith.constant 0 : index
    %c3 = arith.constant 3 : index
    %c0_44 = arith.constant 0 : index
    %c0_45 = arith.constant 0 : index
    %90 = vector.load %arg7[%c0_43, %c3, %c0_44, %c0_45] : memref<1x4x128x32xbf16, #tpu.memory_space<vmem>>, vector<1x1x128x32xbf16>
    %91 = vector.shape_cast %90 : vector<1x1x128x32xbf16> to vector<128x32xbf16>
    %cst_46 = arith.constant dense<0.000000e+00> : vector<16x32xf32>
    %92 = tpu.matmul %80, %91, %cst_46 {dimension_numbers = #tpu.dot_dimension_numbers<[1], [0], [0], [1], [0, 0, 1, 1], [], []>} : vector<16x128xbf16>, vector<128x32xbf16>, vector<16x32xf32> -> vector<16x32xf32>
    %93 = vector.shape_cast %83 : vector<16x32xf32> to vector<1x16x32xf32>
    %94 = vector.shape_cast %86 : vector<16x32xf32> to vector<1x16x32xf32>
    %95 = vector.shape_cast %89 : vector<16x32xf32> to vector<1x16x32xf32>
    %96 = vector.shape_cast %92 : vector<16x32xf32> to vector<1x16x32xf32>
    %97 = tpu.concatenate %93, %94, %95, %96 in 0 : vector<1x16x32xf32>, vector<1x16x32xf32>, vector<1x16x32xf32>, vector<1x16x32xf32> -> vector<4x16x32xf32>
    %98 = arith.truncf %97 : vector<4x16x32xf32> to vector<4x16x32xbf16>
    %c0_47 = arith.constant 0 : index
    %c0_48 = arith.constant 0 : index
    %c0_49 = arith.constant 0 : index
    %c0_50 = arith.constant 0 : index
    %99 = vector.load %arg8[%c0_47, %c0_48, %c0_49, %c0_50] : memref<1x4x128x32xbf16, #tpu.memory_space<vmem>>, vector<1x1x128x32xbf16>
    %100 = vector.shape_cast %99 : vector<1x1x128x32xbf16> to vector<128x32xbf16>
    %cst_51 = arith.constant dense<0.000000e+00> : vector<8x32xf32>
    %101 = tpu.matmul %42, %100, %cst_51 {dimension_numbers = #tpu.dot_dimension_numbers<[1], [0], [0], [1], [0, 0, 1, 1], [], []>} : vector<8x128xbf16>, vector<128x32xbf16>, vector<8x32xf32> -> vector<8x32xf32>
    %c0_52 = arith.constant 0 : index
    %c1_53 = arith.constant 1 : index
    %c0_54 = arith.constant 0 : index
    %c0_55 = arith.constant 0 : index
    %102 = vector.load %arg8[%c0_52, %c1_53, %c0_54, %c0_55] : memref<1x4x128x32xbf16, #tpu.memory_space<vmem>>, vector<1x1x128x32xbf16>
    %103 = vector.shape_cast %102 : vector<1x1x128x32xbf16> to vector<128x32xbf16>
    %cst_56 = arith.constant dense<0.000000e+00> : vector<8x32xf32>
    %104 = tpu.matmul %42, %103, %cst_56 {dimension_numbers = #tpu.dot_dimension_numbers<[1], [0], [0], [1], [0, 0, 1, 1], [], []>} : vector<8x128xbf16>, vector<128x32xbf16>, vector<8x32xf32> -> vector<8x32xf32>
    %c0_57 = arith.constant 0 : index
    %c2_58 = arith.constant 2 : index
    %c0_59 = arith.constant 0 : index
    %c0_60 = arith.constant 0 : index
    %105 = vector.load %arg8[%c0_57, %c2_58, %c0_59, %c0_60] : memref<1x4x128x32xbf16, #tpu.memory_space<vmem>>, vector<1x1x128x32xbf16>
    %106 = vector.shape_cast %105 : vector<1x1x128x32xbf16> to vector<128x32xbf16>
    %cst_61 = arith.constant dense<0.000000e+00> : vector<8x32xf32>
    %107 = tpu.matmul %42, %106, %cst_61 {dimension_numbers = #tpu.dot_dimension_numbers<[1], [0], [0], [1], [0, 0, 1, 1], [], []>} : vector<8x128xbf16>, vector<128x32xbf16>, vector<8x32xf32> -> vector<8x32xf32>
    %c0_62 = arith.constant 0 : index
    %c3_63 = arith.constant 3 : index
    %c0_64 = arith.constant 0 : index
    %c0_65 = arith.constant 0 : index
    %108 = vector.load %arg8[%c0_62, %c3_63, %c0_64, %c0_65] : memref<1x4x128x32xbf16, #tpu.memory_space<vmem>>, vector<1x1x128x32xbf16>
    %109 = vector.shape_cast %108 : vector<1x1x128x32xbf16> to vector<128x32xbf16>
    %cst_66 = arith.constant dense<0.000000e+00> : vector<8x32xf32>
    %110 = tpu.matmul %42, %109, %cst_66 {dimension_numbers = #tpu.dot_dimension_numbers<[1], [0], [0], [1], [0, 0, 1, 1], [], []>} : vector<8x128xbf16>, vector<128x32xbf16>, vector<8x32xf32> -> vector<8x32xf32>
    %111 = vector.shape_cast %101 : vector<8x32xf32> to vector<1x8x32xf32>
    %112 = vector.shape_cast %104 : vector<8x32xf32> to vector<1x8x32xf32>
    %113 = vector.shape_cast %107 : vector<8x32xf32> to vector<1x8x32xf32>
    %114 = vector.shape_cast %110 : vector<8x32xf32> to vector<1x8x32xf32>
    %115 = tpu.concatenate %111, %112, %113, %114 in 0 : vector<1x8x32xf32>, vector<1x8x32xf32>, vector<1x8x32xf32>, vector<1x8x32xf32> -> vector<4x8x32xf32>
    %116 = arith.truncf %115 : vector<4x8x32xf32> to vector<4x8x32xbf16>
    %c0_67 = arith.constant 0 : index
    %c0_68 = arith.constant 0 : index
    %c0_69 = arith.constant 0 : index
    %c0_70 = arith.constant 0 : index
    %117 = vector.load %arg9[%c0_67, %c0_68, %c0_69, %c0_70] : memref<1x4x128x32xbf16, #tpu.memory_space<vmem>>, vector<1x1x128x32xbf16>
    %118 = vector.shape_cast %117 : vector<1x1x128x32xbf16> to vector<128x32xbf16>
    %cst_71 = arith.constant dense<0.000000e+00> : vector<8x32xf32>
    %119 = tpu.matmul %43, %118, %cst_71 {dimension_numbers = #tpu.dot_dimension_numbers<[1], [0], [0], [1], [0, 0, 1, 1], [], []>} : vector<8x128xbf16>, vector<128x32xbf16>, vector<8x32xf32> -> vector<8x32xf32>
    %c0_72 = arith.constant 0 : index
    %c1_73 = arith.constant 1 : index
    %c0_74 = arith.constant 0 : index
    %c0_75 = arith.constant 0 : index
    %120 = vector.load %arg9[%c0_72, %c1_73, %c0_74, %c0_75] : memref<1x4x128x32xbf16, #tpu.memory_space<vmem>>, vector<1x1x128x32xbf16>
    %121 = vector.shape_cast %120 : vector<1x1x128x32xbf16> to vector<128x32xbf16>
    %cst_76 = arith.constant dense<0.000000e+00> : vector<8x32xf32>
    %122 = tpu.matmul %43, %121, %cst_76 {dimension_numbers = #tpu.dot_dimension_numbers<[1], [0], [0], [1], [0, 0, 1, 1], [], []>} : vector<8x128xbf16>, vector<128x32xbf16>, vector<8x32xf32> -> vector<8x32xf32>
    %c0_77 = arith.constant 0 : index
    %c2_78 = arith.constant 2 : index
    %c0_79 = arith.constant 0 : index
    %c0_80 = arith.constant 0 : index
    %123 = vector.load %arg9[%c0_77, %c2_78, %c0_79, %c0_80] : memref<1x4x128x32xbf16, #tpu.memory_space<vmem>>, vector<1x1x128x32xbf16>
    %124 = vector.shape_cast %123 : vector<1x1x128x32xbf16> to vector<128x32xbf16>
    %cst_81 = arith.constant dense<0.000000e+00> : vector<8x32xf32>
    %125 = tpu.matmul %43, %124, %cst_81 {dimension_numbers = #tpu.dot_dimension_numbers<[1], [0], [0], [1], [0, 0, 1, 1], [], []>} : vector<8x128xbf16>, vector<128x32xbf16>, vector<8x32xf32> -> vector<8x32xf32>
    %c0_82 = arith.constant 0 : index
    %c3_83 = arith.constant 3 : index
    %c0_84 = arith.constant 0 : index
    %c0_85 = arith.constant 0 : index
    %126 = vector.load %arg9[%c0_82, %c3_83, %c0_84, %c0_85] : memref<1x4x128x32xbf16, #tpu.memory_space<vmem>>, vector<1x1x128x32xbf16>
    %127 = vector.shape_cast %126 : vector<1x1x128x32xbf16> to vector<128x32xbf16>
    %cst_86 = arith.constant dense<0.000000e+00> : vector<8x32xf32>
    %128 = tpu.matmul %43, %127, %cst_86 {dimension_numbers = #tpu.dot_dimension_numbers<[1], [0], [0], [1], [0, 0, 1, 1], [], []>} : vector<8x128xbf16>, vector<128x32xbf16>, vector<8x32xf32> -> vector<8x32xf32>
    %129 = vector.shape_cast %119 : vector<8x32xf32> to vector<1x8x32xf32>
    %130 = vector.shape_cast %122 : vector<8x32xf32> to vector<1x8x32xf32>
    %131 = vector.shape_cast %125 : vector<8x32xf32> to vector<1x8x32xf32>
    %132 = vector.shape_cast %128 : vector<8x32xf32> to vector<1x8x32xf32>
    %133 = tpu.concatenate %129, %130, %131, %132 in 0 : vector<1x8x32xf32>, vector<1x8x32xf32>, vector<1x8x32xf32>, vector<1x8x32xf32> -> vector<4x8x32xf32>
    "tpu.trace_start"() <{level = 10 : i32, message = "htd,hsd->hts"}> : () -> ()
    %cst_87 = arith.constant dense<0.000000e+00> : vector<4x16x8xf32>
    %134 = tpu.matmul %98, %116, %cst_87 {dimension_numbers = #tpu.dot_dimension_numbers<[2], [2], [1], [1], [0, 0, 0, 1, 1, 1], [0], [0]>} : vector<4x16x32xbf16>, vector<4x8x32xbf16>, vector<4x16x8xf32> -> vector<4x16x8xf32>
    "tpu.trace_stop"() : () -> ()
    %cst_88 = arith.constant 0.176776692 : f32
    %135 = vector.broadcast %cst_88 : f32 to vector<4x16x8xf32>
    %136 = arith.mulf %134, %135 : vector<4x16x8xf32>
    %137 = vector.broadcast %49 : vector<1x1x8xf32> to vector<4x16x8xf32>
    %138 = arith.addf %136, %137 : vector<4x16x8xf32>
    %cst_89 = arith.constant dense<0xFF800000> : vector<4x16xf32>
    %139 = vector.multi_reduction <maximumf>, %138, %cst_89 [2] : vector<4x16x8xf32> to vector<4x16xf32>
    %140 = vector.shape_cast %139 : vector<4x16xf32> to vector<4x16x1xf32>
    %141 = vector.broadcast %140 : vector<4x16x1xf32> to vector<4x16x8xf32>
    %142 = arith.subf %138, %141 : vector<4x16x8xf32>
    %143 = math.exp %142 : vector<4x16x8xf32>
    %cst_90 = arith.constant dense<0.000000e+00> : vector<4x16xf32>
    %144 = vector.multi_reduction <add>, %143, %cst_90 [2] : vector<4x16x8xf32> to vector<4x16xf32>
    %145 = vector.shape_cast %144 : vector<4x16xf32> to vector<4x16x1xf32>
    %146 = tpu.reciprocal %145 {approx = true} : vector<4x16x1xf32> -> vector<4x16x1xf32>
    %147 = vector.broadcast %146 : vector<4x16x1xf32> to vector<4x16x8xf32>
    %148 = arith.mulf %143, %147 : vector<4x16x8xf32>
    "tpu.trace_start"() <{level = 10 : i32, message = "hts,hsd->htd"}> : () -> ()
    %cst_91 = arith.constant dense<0.000000e+00> : vector<4x16x32xf32>
    %149 = tpu.matmul %148, %133, %cst_91 {dimension_numbers = #tpu.dot_dimension_numbers<[2], [1], [1], [2], [0, 0, 0, 1, 1, 2], [0], [0]>} : vector<4x16x8xf32>, vector<4x8x32xf32>, vector<4x16x32xf32> -> vector<4x16x32xf32>
    "tpu.trace_stop"() : () -> ()
    %150 = arith.mulf %133, %133 : vector<4x8x32xf32>
    "tpu.trace_start"() <{level = 10 : i32, message = "hts,hsd->htd"}> : () -> ()
    %cst_92 = arith.constant dense<0.000000e+00> : vector<4x16x32xf32>
    %151 = tpu.matmul %148, %150, %cst_92 {dimension_numbers = #tpu.dot_dimension_numbers<[2], [1], [1], [2], [0, 0, 0, 1, 1, 2], [0], [0]>} : vector<4x16x8xf32>, vector<4x8x32xf32>, vector<4x16x32xf32> -> vector<4x16x32xf32>
    "tpu.trace_stop"() : () -> ()
    %152 = vector.extract_strided_slice %149 {offsets = [0, 0, 0], sizes = [1, 16, 32], strides = [1, 1, 1]} : vector<4x16x32xf32> to vector<1x16x32xf32>
    %153 = vector.shape_cast %152 : vector<1x16x32xf32> to vector<16x32xf32>
    %154 = vector.extract_strided_slice %149 {offsets = [1, 0, 0], sizes = [1, 16, 32], strides = [1, 1, 1]} : vector<4x16x32xf32> to vector<1x16x32xf32>
    %155 = vector.shape_cast %154 : vector<1x16x32xf32> to vector<16x32xf32>
    %156 = vector.extract_strided_slice %149 {offsets = [2, 0, 0], sizes = [1, 16, 32], strides = [1, 1, 1]} : vector<4x16x32xf32> to vector<1x16x32xf32>
    %157 = vector.shape_cast %156 : vector<1x16x32xf32> to vector<16x32xf32>
    %158 = vector.extract_strided_slice %149 {offsets = [3, 0, 0], sizes = [1, 16, 32], strides = [1, 1, 1]} : vector<4x16x32xf32> to vector<1x16x32xf32>
    %159 = vector.shape_cast %158 : vector<1x16x32xf32> to vector<16x32xf32>
    %160 = tpu.concatenate %153, %155, %157, %159 in 1 : vector<16x32xf32>, vector<16x32xf32>, vector<16x32xf32>, vector<16x32xf32> -> vector<16x128xf32>
    %161 = vector.extract_strided_slice %151 {offsets = [0, 0, 0], sizes = [1, 16, 32], strides = [1, 1, 1]} : vector<4x16x32xf32> to vector<1x16x32xf32>
    %162 = vector.shape_cast %161 : vector<1x16x32xf32> to vector<16x32xf32>
    %163 = vector.extract_strided_slice %151 {offsets = [1, 0, 0], sizes = [1, 16, 32], strides = [1, 1, 1]} : vector<4x16x32xf32> to vector<1x16x32xf32>
    %164 = vector.shape_cast %163 : vector<1x16x32xf32> to vector<16x32xf32>
    %165 = vector.extract_strided_slice %151 {offsets = [2, 0, 0], sizes = [1, 16, 32], strides = [1, 1, 1]} : vector<4x16x32xf32> to vector<1x16x32xf32>
    %166 = vector.shape_cast %165 : vector<1x16x32xf32> to vector<16x32xf32>
    %167 = vector.extract_strided_slice %151 {offsets = [3, 0, 0], sizes = [1, 16, 32], strides = [1, 1, 1]} : vector<4x16x32xf32> to vector<1x16x32xf32>
    %168 = vector.shape_cast %167 : vector<1x16x32xf32> to vector<16x32xf32>
    %169 = tpu.concatenate %162, %164, %166, %168 in 1 : vector<16x32xf32>, vector<16x32xf32>, vector<16x32xf32>, vector<16x32xf32> -> vector<16x128xf32>
    %170 = arith.mulf %160, %160 : vector<16x128xf32>
    %171 = arith.subf %169, %170 : vector<16x128xf32>
    %cst_93 = arith.constant 0.000000e+00 : f32
    %172 = vector.broadcast %cst_93 : f32 to vector<16x128xf32>
    %173 = arith.maximumf %171, %172 : vector<16x128xf32>
    %cst_94 = arith.constant 9.99999974E-6 : f32
    %174 = vector.broadcast %cst_94 : f32 to vector<16x128xf32>
    %175 = arith.addf %173, %174 : vector<16x128xf32>
    %176 = math.sqrt %175 : vector<16x128xf32>
    %177 = arith.mulf %176, %79 : vector<16x128xf32>
    %178 = arith.addf %177, %160 : vector<16x128xf32>
    %179 = vector.broadcast %5 : vector<16x1xf32> to vector<16x128xf32>
    %180 = arith.mulf %178, %179 : vector<16x128xf32>
    %181 = tpu.iota {dimensions = array<i32: 0>} : vector<16x1xi32>
    %c0_i32_95 = arith.constant 0 : i32
    %182 = vector.broadcast %c0_i32_95 : i32 to vector<16x1xi32>
    %183 = arith.cmpi sgt, %181, %182 : vector<16x1xi32>
    %c1_i32 = arith.constant 1 : i32
    %184 = tpu.dynamic_rotate %180 by %c1_i32 dim 0 : vector<16x128xf32>, i32 -> vector<16x128xf32>
    %cst_96 = arith.constant 0.000000e+00 : f32
    %185 = vector.shape_cast %183 : vector<16x1xi1> to vector<16x1xi1>
    %186 = vector.broadcast %185 : vector<16x1xi1> to vector<16x128xi1>
    %187 = vector.broadcast %cst_96 : f32 to vector<16x128xf32>
    %188 = arith.select %186, %184, %187 : vector<16x128xi1>, vector<16x128xf32>
    %189 = arith.truncf %188 : vector<16x128xf32> to vector<16x128xbf16>
    %c15_i32 = arith.constant 15 : i32
    %190 = vector.broadcast %c15_i32 : i32 to vector<16x1xi32>
    %191 = arith.cmpi slt, %181, %190 : vector<16x1xi32>
    %c15_i32_97 = arith.constant 15 : i32
    %192 = tpu.dynamic_rotate %180 by %c15_i32_97 dim 0 : vector<16x128xf32>, i32 -> vector<16x128xf32>
    %cst_98 = arith.constant 0.000000e+00 : f32
    %193 = vector.shape_cast %191 : vector<16x1xi1> to vector<16x1xi1>
    %194 = vector.broadcast %193 : vector<16x1xi1> to vector<16x128xi1>
    %195 = vector.broadcast %cst_98 : f32 to vector<16x128xf32>
    %196 = arith.select %194, %192, %195 : vector<16x128xi1>, vector<16x128xf32>
    %197 = arith.truncf %196 : vector<16x128xf32> to vector<16x128xbf16>
    %198 = arith.truncf %180 : vector<16x128xf32> to vector<16x128xbf16>
    %199 = tpu.concatenate %189, %198, %197 in 1 : vector<16x128xbf16>, vector<16x128xbf16>, vector<16x128xbf16> -> vector<16x384xbf16>
    %c0_99 = arith.constant 0 : index
    %c0_100 = arith.constant 0 : index
    %c0_101 = arith.constant 0 : index
    %200 = vector.load %arg10[%c0_99, %c0_100, %c0_101] : memref<1x384x128xbf16, #tpu.memory_space<vmem>>, vector<1x384x128xbf16>
    %201 = vector.shape_cast %200 : vector<1x384x128xbf16> to vector<384x128xbf16>
    %cst_102 = arith.constant dense<0.000000e+00> : vector<16x128xf32>
    %202 = tpu.matmul %199, %201, %cst_102 {dimension_numbers = #tpu.dot_dimension_numbers<[1], [0], [0], [1], [0, 0, 1, 1], [], []>} : vector<16x384xbf16>, vector<384x128xbf16>, vector<16x128xf32> -> vector<16x128xf32>
    %c0_103 = arith.constant 0 : index
    %c0_104 = arith.constant 0 : index
    %c0_105 = arith.constant 0 : index
    %203 = vector.load %arg11[%c0_103, %c0_104, %c0_105] : memref<1x1x128xf32, #tpu.memory_space<vmem>>, vector<1x1x128xf32>
    %204 = vector.shape_cast %203 : vector<1x1x128xf32> to vector<1x128xf32>
    %205 = vector.broadcast %204 : vector<1x128xf32> to vector<16x128xf32>
    %206 = arith.addf %202, %205 : vector<16x128xf32>
    %c0_106 = arith.constant 0 : index
    %c0_107 = arith.constant 0 : index
    %207 = vector.load %arg13[%c0_106, %c0_107] : memref<16x128xf32, #tpu.memory_space<vmem>>, vector<16x128xf32>
    tpu.vector_store %arg13[%c0_106, %c0_107], %206 {strides = array<i32>} : memref<16x128xf32, #tpu.memory_space<vmem>>, vector<16x128xf32>,
    %c1_i32_108 = arith.constant 1 : i32
    %208 = arith.cmpi eq, %arg1, %c1_i32_108 : i32
    %209 = arith.extui %208 : i1 to i32
    %c0_i32_109 = arith.constant 0 : i32
    %210 = arith.cmpi ne, %209, %c0_i32_109 : i32
    scf.if %210 {
      %211 = vector.broadcast %5 : vector<16x1xf32> to vector<16x128xf32>
      %212 = arith.mulf %206, %211 : vector<16x128xf32>
      %c0_110 = arith.constant 0 : index
      %c0_111 = arith.constant 0 : index
      %c0_112 = arith.constant 0 : index
      %213 = vector.load %arg12[%c0_110, %c0_111, %c0_112] : memref<1x16x128xf32, #tpu.memory_space<vmem>>, vector<1x16x128xf32>
      %214 = vector.shape_cast %213 : vector<1x16x128xf32> to vector<16x128xf32>
      %215 = vector.shape_cast %212 : vector<16x128xf32> to vector<1x16x128xf32>
      tpu.vector_store %arg12[%c0_110, %c0_111, %c0_112], %215 {strides = array<i32>} : memref<1x16x128xf32, #tpu.memory_space<vmem>>, vector<1x16x128xf32>,
    } else {
    }
    return
  }
  func.func @transform_0(%arg0: i32, %arg1: i32) -> (i32, i32, i32) {
    %c0_i32 = arith.constant 0 : i32
    %c0_i32_0 = arith.constant 0 : i32
    %c0_i32_1 = arith.constant 0 : i32
    return %arg0, %c0_i32, %c0_i32_0 : i32, i32, i32
  }
  func.func @transform_1(%arg0: i32, %arg1: i32) -> (i32, i32, i32) {
    %c0_i32 = arith.constant 0 : i32
    %c0_i32_0 = arith.constant 0 : i32
    %c0_i32_1 = arith.constant 0 : i32
    return %arg0, %c0_i32, %c0_i32_0 : i32, i32, i32
  }
  func.func @transform_2(%arg0: i32, %arg1: i32) -> (i32, i32, i32) {
    %c0_i32 = arith.constant 0 : i32
    %c0_i32_0 = arith.constant 0 : i32
    %c0_i32_1 = arith.constant 0 : i32
    return %arg0, %c0_i32, %c0_i32_0 : i32, i32, i32
  }
  func.func @transform_3(%arg0: i32, %arg1: i32) -> (i32, i32, i32) {
    %c0_i32 = arith.constant 0 : i32
    %c0_i32_0 = arith.constant 0 : i32
    %c0_i32_1 = arith.constant 0 : i32
    return %arg0, %c0_i32, %c0_i32_0 : i32, i32, i32
  }
  func.func @transform_4(%arg0: i32, %arg1: i32) -> (i32, i32, i32) {
    %c0_i32 = arith.constant 0 : i32
    %c0_i32_0 = arith.constant 0 : i32
    %c0_i32_1 = arith.constant 0 : i32
    return %arg0, %c0_i32, %c0_i32_0 : i32, i32, i32
  }
  func.func @transform_5(%arg0: i32, %arg1: i32) -> (i32, i32, i32, i32) {
    %c0_i32 = arith.constant 0 : i32
    %c0_i32_0 = arith.constant 0 : i32
    %c0_i32_1 = arith.constant 0 : i32
    %c0_i32_2 = arith.constant 0 : i32
    return %arg1, %c0_i32, %c0_i32_0, %c0_i32_1 : i32, i32, i32, i32
  }
  func.func @transform_6(%arg0: i32, %arg1: i32) -> (i32, i32, i32, i32) {
    %c0_i32 = arith.constant 0 : i32
    %c0_i32_0 = arith.constant 0 : i32
    %c0_i32_1 = arith.constant 0 : i32
    %c0_i32_2 = arith.constant 0 : i32
    return %arg1, %c0_i32, %c0_i32_0, %c0_i32_1 : i32, i32, i32, i32
  }
  func.func @transform_7(%arg0: i32, %arg1: i32) -> (i32, i32, i32, i32) {
    %c0_i32 = arith.constant 0 : i32
    %c0_i32_0 = arith.constant 0 : i32
    %c0_i32_1 = arith.constant 0 : i32
    %c0_i32_2 = arith.constant 0 : i32
    return %arg1, %c0_i32, %c0_i32_0, %c0_i32_1 : i32, i32, i32, i32
  }
  func.func @transform_8(%arg0: i32, %arg1: i32) -> (i32, i32, i32) {
    %c0_i32 = arith.constant 0 : i32
    %c0_i32_0 = arith.constant 0 : i32
    %c0_i32_1 = arith.constant 0 : i32
    return %arg1, %c0_i32, %c0_i32_0 : i32, i32, i32
  }
  func.func @transform_9(%arg0: i32, %arg1: i32) -> (i32, i32, i32) {
    %c0_i32 = arith.constant 0 : i32
    %c0_i32_0 = arith.constant 0 : i32
    %c0_i32_1 = arith.constant 0 : i32
    return %arg1, %c0_i32, %c0_i32_0 : i32, i32, i32
  }
  func.func @transform_10(%arg0: i32, %arg1: i32) -> (i32, i32, i32) {
    %c0_i32 = arith.constant 0 : i32
    %c0_i32_0 = arith.constant 0 : i32
    %c0_i32_1 = arith.constant 0 : i32
    return %arg0, %c0_i32, %c0_i32_0 : i32, i32, i32
  }
}

</mosaic_0001>

<llo_original>
// kernel: tpu_custom_call.1
$region0: #{tpu_custom_call.1}
  #allocation0 [shape = 'u32[]', space=smem, size = 0x4, offset = 0x4, fixed_abs, tag = 'smem constant byte address 0x4 - core index']
  #allocation1 [shape = 'u32[72,128]{1,0:T(1,128)}', space=vmem, size = 0x9000, scoped, tag = 'internal scratch']
  #allocation2 [shape = 'f32[16,128]{1,0:T(8,128)}', space=vmem, size = 0x2000, scoped, tag = 'scratch operand']
  %s0 = inlined_call_operand.vmem [shape: f32[4,16,128], index: 0, kind: input, shape index: {}]
  %s1 = inlined_call_operand.vmem [shape: f32[4,16,1], index: 1, kind: input, shape index: {}]
  %s2 = inlined_call_operand.vmem [shape: f32[4,8,128], index: 2, kind: input, shape index: {}]
  %s3 = inlined_call_operand.vmem [shape: f32[4,8,1], index: 3, kind: input, shape index: {}]
  %s4 = inlined_call_operand.vmem [shape: f32[4,1,8], index: 4, kind: input, shape index: {}]
  %s5 = inlined_call_operand.vmem [shape: bf16[2,4,128,32], index: 5, kind: input, shape index: {}]
  %s6 = inlined_call_operand.vmem [shape: bf16[2,4,128,32], index: 6, kind: input, shape index: {}]
  %s7 = inlined_call_operand.vmem [shape: bf16[2,4,128,32], index: 7, kind: input, shape index: {}]
  %s8 = inlined_call_operand.vmem [shape: bf16[2,384,128], index: 8, kind: input, shape index: {}]
  %s9 = inlined_call_operand.vmem [shape: f32[2,1,128], index: 9, kind: input, shape index: {}]
  %s10 = inlined_call_operand.hbm [shape: f32[4,16,128], index: 10, kind: output, shape index: {}]
  %s11 = sld [smem:[#allocation0]]
  $region81: #{tpu_custom_call.1} parent=0
    _
  %s13 = ssub.s32 1, %s11
  %s14 = scalar_select 0, %s13, %s11
  $region1: #{tpu_custom_call.1} parent=0
    #allocation3 [shape = 'u8[16384]{0}', space=vmem, size = 0x4000, scoped, tag = 'output window, operand 0']
    #allocation4 [shape = 's32[2]{0}', space=sflag, size = 0x8, scoped, tag = 'scoped memory for tpu_custom_call.1']
    %15 = vsyncpa [#allocation4], 0
    %s16 = scalar_lea.sflag [#allocation4], 1
    %17 = vsyncpa %s16, 0
    loop: start=0, step=1, limit=10
    $region2: #{tpu_custom_call.1} parent=1 // loop_pre_header
      _
    $region3: #{tpu_custom_call.1} parent=1 // loop_header
      %s19 = sphi 0, %s23
      %p20 = scmp.ge.s32.totalorder %s19, 10
      %s26 = sphi 0, %s38
      %s27 = sphi 0, %s34
      %s28 = sphi 0, %s26
      %s29 = sphi 0, %s27
      %s30 = sphi 0, %s28
      %s31 = sphi 0, %s29
      %s41 = sphi 0, %s43
      %s44 = sphi 0, %s41
      %s45 = sphi 0, %s44
      %s61 = sphi 0, %s45
      %s67 = sphi 0, %s69
      %s70 = sphi 0, %s67
      %s71 = sphi 0, %s70
      %s87 = sphi 0, %s71
      %s93 = sphi 0, %s95
      %s96 = sphi 0, %s93
      %s97 = sphi 0, %s96
      %s113 = sphi 0, %s97
      %s119 = sphi 0, %s121
      %s122 = sphi 0, %s119
      %s123 = sphi 0, %s122
      %s139 = sphi 0, %s123
      %s145 = sphi 0, %s147
      %s148 = sphi 0, %s145
      %s149 = sphi 0, %s148
      %s165 = sphi 0, %s149
      %s171 = sphi 0, %s173
      %s174 = sphi 0, %s171
      %s175 = sphi 0, %s174
      %s191 = sphi 0, %s175
      %s197 = sphi 0, %s199
      %s200 = sphi 0, %s197
      %s201 = sphi 0, %s200
      %s217 = sphi 0, %s201
      %s223 = sphi 0, %s225
      %s226 = sphi 0, %s223
      %s227 = sphi 0, %s226
      %s243 = sphi 0, %s227
      %s249 = sphi 0, %s251
      %s252 = sphi 0, %s249
      %s253 = sphi 0, %s252
      %s269 = sphi 0, %s253
      %s275 = sphi 0, %s277
      %s278 = sphi 0, %s275
      %s279 = sphi 0, %s278
      %s295 = sphi 0, %s279
      %s301 = sphi 0, %s303
      %s304 = sphi 0, %s301
      %s305 = sphi 0, %s304
      %s321 = sphi 0, %s305
    $region4: #{tpu_custom_call.1} parent=1 // loop_header_branch
      %22 = sbr.rel (%p20) target = $region8
    $region5: #{tpu_custom_call.1} parent=1 // loop_body
      %s24 = ssub.s32 %s19, 1
      %s25 = ssub.s32 %s19, 2
      %s32 = sadd.s32 1, %s27
      %p33 = scmp.ge.s32.totalorder %s32, 2
      %s34 = scalar_select %p33, 0, %s32
      %s35 = sadd.s32 1, %s26
      %s36 = scalar_select %p33, %s35, %s26
      %p37 = scmp.ge.s32.totalorder %s36, 4
      %s38 = scalar_select %p37, 0, %s36
      %s39 = ssub.s32 %s26, %s38
      %p40 = scmp.eq.s32.totalorder %s39, 0
      %s42 = sadd.s32 %s41, 1
      %s43 = scalar_select %p40, %s41, %s42
      %p46 = pneg %p40
      %p47 = scmp.eq.s32.totalorder %s19, 7
      %p48 = por %p46, %p47
      %p49 = scmp.ne.s32.totalorder %s41, %s44
      %p50 = scmp.eq.s32.totalorder %s19, 0
      %p51 = por %p49, %p50
      %p52 = scmp.ne.s32.totalorder %s41, %s44
      %p53 = scmp.eq.s32.totalorder %s24, 7
      %p54 = por %p52, %p53
      %p55 = scmp.ne.s32.totalorder %s44, %s45
      %p56 = scmp.eq.s32.totalorder %s24, 0
      %p57 = por %p55, %p56
      %p58 = scmp.ne.s32.totalorder %s44, %s45
      %p59 = scmp.eq.s32.totalorder %s25, 7
      %p60 = por %p58, %p59
      %p62 = scmp.ne.s32.totalorder %s45, %s61
      %p63 = scmp.eq.s32.totalorder %s25, 0
      %p64 = por %p62, %p63
      %s65 = ssub.s32 %s26, %s38
      %p66 = scmp.eq.s32.totalorder %s65, 0
      %s68 = sadd.s32 %s67, 1
      %s69 = scalar_select %p66, %s67, %s68
      %p72 = pneg %p66
      %p73 = scmp.eq.s32.totalorder %s19, 7
      %p74 = por %p72, %p73
      %p75 = scmp.ne.s32.totalorder %s67, %s70
      %p76 = scmp.eq.s32.totalorder %s19, 0
      %p77 = por %p75, %p76
      %p78 = scmp.ne.s32.totalorder %s67, %s70
      %p79 = scmp.eq.s32.totalorder %s24, 7
      %p80 = por %p78, %p79
      %p81 = scmp.ne.s32.totalorder %s70, %s71
      %p82 = scmp.eq.s32.totalorder %s24, 0
      %p83 = por %p81, %p82
      %p84 = scmp.ne.s32.totalorder %s70, %s71
      %p85 = scmp.eq.s32.totalorder %s25, 7
      %p86 = por %p84, %p85
      %p88 = scmp.ne.s32.totalorder %s71, %s87
      %p89 = scmp.eq.s32.totalorder %s25, 0
      %p90 = por %p88, %p89
      %s91 = ssub.s32 %s26, %s38
      %p92 = scmp.eq.s32.totalorder %s91, 0
      %s94 = sadd.s32 %s93, 1
      %s95 = scalar_select %p92, %s93, %s94
      %p98 = pneg %p92
      %p99 = scmp.eq.s32.totalorder %s19, 7
      %p100 = por %p98, %p99
      %p101 = scmp.ne.s32.totalorder %s93, %s96
      %p102 = scmp.eq.s32.totalorder %s19, 0
      %p103 = por %p101, %p102
      %p104 = scmp.ne.s32.totalorder %s93, %s96
      %p105 = scmp.eq.s32.totalorder %s24, 7
      %p106 = por %p104, %p105
      %p107 = scmp.ne.s32.totalorder %s96, %s97
      %p108 = scmp.eq.s32.totalorder %s24, 0
      %p109 = por %p107, %p108
      %p110 = scmp.ne.s32.totalorder %s96, %s97
      %p111 = scmp.eq.s32.totalorder %s25, 7
      %p112 = por %p110, %p111
      %p114 = scmp.ne.s32.totalorder %s97, %s113
      %p115 = scmp.eq.s32.totalorder %s25, 0
      %p116 = por %p114, %p115
      %s117 = ssub.s32 %s26, %s38
      %p118 = scmp.eq.s32.totalorder %s117, 0
      %s120 = sadd.s32 %s119, 1
      %s121 = scalar_select %p118, %s119, %s120
      %p124 = pneg %p118
      %p125 = scmp.eq.s32.totalorder %s19, 7
      %p126 = por %p124, %p125
      %p127 = scmp.ne.s32.totalorder %s119, %s122
      %p128 = scmp.eq.s32.totalorder %s19, 0
      %p129 = por %p127, %p128
      %p130 = scmp.ne.s32.totalorder %s119, %s122
      %p131 = scmp.eq.s32.totalorder %s24, 7
      %p132 = por %p130, %p131
      %p133 = scmp.ne.s32.totalorder %s122, %s123
      %p134 = scmp.eq.s32.totalorder %s24, 0
      %p135 = por %p133, %p134
      %p136 = scmp.ne.s32.totalorder %s122, %s123
      %p137 = scmp.eq.s32.totalorder %s25, 7
      %p138 = por %p136, %p137
      %p140 = scmp.ne.s32.totalorder %s123, %s139
      %p141 = scmp.eq.s32.totalorder %s25, 0
      %p142 = por %p140, %p141
      %s143 = ssub.s32 %s26, %s38
      %p144 = scmp.eq.s32.totalorder %s143, 0
      %s146 = sadd.s32 %s145, 1
      %s147 = scalar_select %p144, %s145, %s146
      %p150 = pneg %p144
      %p151 = scmp.eq.s32.totalorder %s19, 7
      %p152 = por %p150, %p151
      %p153 = scmp.ne.s32.totalorder %s145, %s148
      %p154 = scmp.eq.s32.totalorder %s19, 0
      %p155 = por %p153, %p154
      %p156 = scmp.ne.s32.totalorder %s145, %s148
      %p157 = scmp.eq.s32.totalorder %s24, 7
      %p158 = por %p156, %p157
      %p159 = scmp.ne.s32.totalorder %s148, %s149
      %p160 = scmp.eq.s32.totalorder %s24, 0
      %p161 = por %p159, %p160
      %p162 = scmp.ne.s32.totalorder %s148, %s149
      %p163 = scmp.eq.s32.totalorder %s25, 7
      %p164 = por %p162, %p163
      %p166 = scmp.ne.s32.totalorder %s149, %s165
      %p167 = scmp.eq.s32.totalorder %s25, 0
      %p168 = por %p166, %p167
      %s169 = ssub.s32 %s27, %s34
      %p170 = scmp.eq.s32.totalorder %s169, 0
      %s172 = sadd.s32 %s171, 1
      %s173 = scalar_select %p170, %s171, %s172
      %p176 = pneg %p170
      %p177 = scmp.eq.s32.totalorder %s19, 7
      %p178 = por %p176, %p177
      %p179 = scmp.ne.s32.totalorder %s171, %s174
      %p180 = scmp.eq.s32.totalorder %s19, 0
      %p181 = por %p179, %p180
      %p182 = scmp.ne.s32.totalorder %s171, %s174
      %p183 = scmp.eq.s32.totalorder %s24, 7
      %p184 = por %p182, %p183
      %p185 = scmp.ne.s32.totalorder %s174, %s175
      %p186 = scmp.eq.s32.totalorder %s24, 0
      %p187 = por %p185, %p186
      %p188 = scmp.ne.s32.totalorder %s174, %s175
      %p189 = scmp.eq.s32.totalorder %s25, 7
      %p190 = por %p188, %p189
      %p192 = scmp.ne.s32.totalorder %s175, %s191
      %p193 = scmp.eq.s32.totalorder %s25, 0
      %p194 = por %p192, %p193
      %s195 = ssub.s32 %s27, %s34
      %p196 = scmp.eq.s32.totalorder %s195, 0
      %s198 = sadd.s32 %s197, 1
      %s199 = scalar_select %p196, %s197, %s198
      %p202 = pneg %p196
      %p203 = scmp.eq.s32.totalorder %s19, 7
      %p204 = por %p202, %p203
      %p205 = scmp.ne.s32.totalorder %s197, %s200
      %p206 = scmp.eq.s32.totalorder %s19, 0
      %p207 = por %p205, %p206
      %p208 = scmp.ne.s32.totalorder %s197, %s200
      %p209 = scmp.eq.s32.totalorder %s24, 7
      %p210 = por %p208, %p209
      %p211 = scmp.ne.s32.totalorder %s200, %s201
      %p212 = scmp.eq.s32.totalorder %s24, 0
      %p213 = por %p211, %p212
      %p214 = scmp.ne.s32.totalorder %s200, %s201
      %p215 = scmp.eq.s32.totalorder %s25, 7
      %p216 = por %p214, %p215
      %p218 = scmp.ne.s32.totalorder %s201, %s217
      %p219 = scmp.eq.s32.totalorder %s25, 0
      %p220 = por %p218, %p219
      %s221 = ssub.s32 %s27, %s34
      %p222 = scmp.eq.s32.totalorder %s221, 0
      %s224 = sadd.s32 %s223, 1
      %s225 = scalar_select %p222, %s223, %s224
      %p228 = pneg %p222
      %p229 = scmp.eq.s32.totalorder %s19, 7
      %p230 = por %p228, %p229
      %p231 = scmp.ne.s32.totalorder %s223, %s226
      %p232 = scmp.eq.s32.totalorder %s19, 0
      %p233 = por %p231, %p232
      %p234 = scmp.ne.s32.totalorder %s223, %s226
      %p235 = scmp.eq.s32.totalorder %s24, 7
      %p236 = por %p234, %p235
      %p237 = scmp.ne.s32.totalorder %s226, %s227
      %p238 = scmp.eq.s32.totalorder %s24, 0
      %p239 = por %p237, %p238
      %p240 = scmp.ne.s32.totalorder %s226, %s227
      %p241 = scmp.eq.s32.totalorder %s25, 7
      %p242 = por %p240, %p241
      %p244 = scmp.ne.s32.totalorder %s227, %s243
      %p245 = scmp.eq.s32.totalorder %s25, 0
      %p246 = por %p244, %p245
      %s247 = ssub.s32 %s27, %s34
      %p248 = scmp.eq.s32.totalorder %s247, 0
      %s250 = sadd.s32 %s249, 1
      %s251 = scalar_select %p248, %s249, %s250
      %p254 = pneg %p248
      %p255 = scmp.eq.s32.totalorder %s19, 7
      %p256 = por %p254, %p255
      %p257 = scmp.ne.s32.totalorder %s249, %s252
      %p258 = scmp.eq.s32.totalorder %s19, 0
      %p259 = por %p257, %p258
      %p260 = scmp.ne.s32.totalorder %s249, %s252
      %p261 = scmp.eq.s32.totalorder %s24, 7
      %p262 = por %p260, %p261
      %p263 = scmp.ne.s32.totalorder %s252, %s253
      %p264 = scmp.eq.s32.totalorder %s24, 0
      %p265 = por %p263, %p264
      %p266 = scmp.ne.s32.totalorder %s252, %s253
      %p267 = scmp.eq.s32.totalorder %s25, 7
      %p268 = por %p266, %p267
      %p270 = scmp.ne.s32.totalorder %s253, %s269
      %p271 = scmp.eq.s32.totalorder %s25, 0
      %p272 = por %p270, %p271
      %s273 = ssub.s32 %s27, %s34
      %p274 = scmp.eq.s32.totalorder %s273, 0
      %s276 = sadd.s32 %s275, 1
      %s277 = scalar_select %p274, %s275, %s276
      %p280 = pneg %p274
      %p281 = scmp.eq.s32.totalorder %s19, 7
      %p282 = por %p280, %p281
      %p283 = scmp.ne.s32.totalorder %s275, %s278
      %p284 = scmp.eq.s32.totalorder %s19, 0
      %p285 = por %p283, %p284
      %p286 = scmp.ne.s32.totalorder %s275, %s278
      %p287 = scmp.eq.s32.totalorder %s24, 7
      %p288 = por %p286, %p287
      %p289 = scmp.ne.s32.totalorder %s278, %s279
      %p290 = scmp.eq.s32.totalorder %s24, 0
      %p291 = por %p289, %p290
      %p292 = scmp.ne.s32.totalorder %s278, %s279
      %p293 = scmp.eq.s32.totalorder %s25, 7
      %p294 = por %p292, %p293
      %p296 = scmp.ne.s32.totalorder %s279, %s295
      %p297 = scmp.eq.s32.totalorder %s25, 0
      %p298 = por %p296, %p297
      %s299 = ssub.s32 %s26, %s38
      %p300 = scmp.eq.s32.totalorder %s299, 0
      %s302 = sadd.s32 %s301, 1
      %s303 = scalar_select %p300, %s301, %s302
      %p306 = pneg %p300
      %p307 = scmp.eq.s32.totalorder %s19, 7
      %p308 = por %p306, %p307
      %p309 = scmp.ne.s32.totalorder %s301, %s304
      %p310 = scmp.eq.s32.totalorder %s19, 0
      %p311 = por %p309, %p310
      %p312 = scmp.ne.s32.totalorder %s301, %s304
      %p313 = scmp.eq.s32.totalorder %s24, 7
      %p314 = por %p312, %p313
      %p315 = scmp.ne.s32.totalorder %s304, %s305
      %p316 = scmp.eq.s32.totalorder %s24, 0
      %p317 = por %p315, %p316
      %p318 = scmp.ne.s32.totalorder %s304, %s305
      %p319 = scmp.eq.s32.totalorder %s25, 7
      %p320 = por %p318, %p319
      %p322 = scmp.ne.s32.totalorder %s305, %s321
      %p323 = scmp.eq.s32.totalorder %s25, 0
      %p324 = por %p322, %p323
      %p325 = scmp.le.s32.totalorder 1, %s19
      %p326 = scmp.lt.s32.totalorder %s19, 9
      %p327 = pnand %p325, %p326
      %p328 = pneg %p327
      // Predicated region
      $region9: #{tpu_custom_call.1} parent=5 // pred_check
        _
      $region10: #{tpu_custom_call.1} parent=5 // pred_check_branch
        %330 = sbr.rel (%p327) target = $region12
      $region11: #{tpu_custom_call.1} parent=5 // pred_region
        %s331 = ssub.s32 %s19, 1
      $region12: #{tpu_custom_call.1} parent=5 // pred_fallthru
        _
      %p332 = scmp.lt.s32.totalorder %s19, 8
      // Predicated region
      $region13: #{tpu_custom_call.1} parent=5 // pred_check
        %p333 = pneg %p332
      $region14: #{tpu_custom_call.1} parent=5 // pred_check_branch
        %335 = sbr.rel (%p333) target = $region16
      $region15: #{tpu_custom_call.1} parent=5 // pred_region
        // Predicated region
        $region17: #{tpu_custom_call.1} parent=15 // pred_check
          %p336 = pneg %p51
        $region18: #{tpu_custom_call.1} parent=15 // pred_check_branch
          %338 = sbr.rel (%p336) target = $region20
        $region19: #{tpu_custom_call.1} parent=15 // pred_region
          %p339 = scmp.lt.s32.totalorder %s26, 3
          %s340 = scalar_select %p339, %s26, 3
          %s341 = smul.addr %s340, 2
          %s342 = smul.addr %s341, 8
          %s343 = scalar_lea.vmem %s0, %s342
        $region20: #{tpu_custom_call.1} parent=15 // pred_fallthru
          _
        // Predicated region
        $region21: #{tpu_custom_call.1} parent=15 // pred_check
          %p344 = pneg %p77
        $region22: #{tpu_custom_call.1} parent=15 // pred_check_branch
          %346 = sbr.rel (%p344) target = $region24
        $region23: #{tpu_custom_call.1} parent=15 // pred_region
          %p347 = scmp.lt.s32.totalorder %s26, 3
          %s348 = scalar_select %p347, %s26, 3
          %s349 = smul.addr %s348, 2
          %s350 = smul.addr %s349, 8
          %s351 = scalar_lea.vmem %s1, %s350
        $region24: #{tpu_custom_call.1} parent=15 // pred_fallthru
          _
        // Predicated region
        $region25: #{tpu_custom_call.1} parent=15 // pred_check
          %p352 = pneg %p103
        $region26: #{tpu_custom_call.1} parent=15 // pred_check_branch
          %354 = sbr.rel (%p352) target = $region28
        $region27: #{tpu_custom_call.1} parent=15 // pred_region
          %p355 = scmp.lt.s32.totalorder %s26, 3
          %s356 = scalar_select %p355, %s26, 3
          %s357 = smul.addr %s356, 8
          %s358 = scalar_lea.vmem %s2, %s357
        $region28: #{tpu_custom_call.1} parent=15 // pred_fallthru
          _
        // Predicated region
        $region29: #{tpu_custom_call.1} parent=15 // pred_check
          %p359 = pneg %p129
        $region30: #{tpu_custom_call.1} parent=15 // pred_check_branch
          %361 = sbr.rel (%p359) target = $region32
        $region31: #{tpu_custom_call.1} parent=15 // pred_region
          %p362 = scmp.lt.s32.totalorder %s26, 3
          %s363 = scalar_select %p362, %s26, 3
          %s364 = smul.addr %s363, 8
          %s365 = scalar_lea.vmem %s3, %s364
        $region32: #{tpu_custom_call.1} parent=15 // pred_fallthru
          _
        // Predicated region
        $region33: #{tpu_custom_call.1} parent=15 // pred_check
          %p366 = pneg %p155
        $region34: #{tpu_custom_call.1} parent=15 // pred_check_branch
          %368 = sbr.rel (%p366) target = $region36
        $region35: #{tpu_custom_call.1} parent=15 // pred_region
          %p369 = scmp.lt.s32.totalorder %s26, 3
          %s370 = scalar_select %p369, %s26, 3
          %s371 = scalar_lea.vmem %s4, %s370
        $region36: #{tpu_custom_call.1} parent=15 // pred_fallthru
          _
        // Predicated region
        $region37: #{tpu_custom_call.1} parent=15 // pred_check
          %p372 = pneg %p181
        $region38: #{tpu_custom_call.1} parent=15 // pred_check_branch
          %374 = sbr.rel (%p372) target = $region40
        $region39: #{tpu_custom_call.1} parent=15 // pred_region
          %p375 = scmp.lt.s32.totalorder %s27, 1
          %s376 = scalar_select %p375, %s27, 1
          %s377 = smul.addr %s376, 64
          %s378 = smul.addr %s377, 4
          %s379 = scalar_lea.vmem %s5, %s378
        $region40: #{tpu_custom_call.1} parent=15 // pred_fallthru
          _
        // Predicated region
        $region41: #{tpu_custom_call.1} parent=15 // pred_check
          %p380 = pneg %p207
        $region42: #{tpu_custom_call.1} parent=15 // pred_check_branch
          %382 = sbr.rel (%p380) target = $region44
        $region43: #{tpu_custom_call.1} parent=15 // pred_region
          %p383 = scmp.lt.s32.totalorder %s27, 1
          %s384 = scalar_select %p383, %s27, 1
          %s385 = smul.addr %s384, 64
          %s386 = smul.addr %s385, 4
          %s387 = scalar_lea.vmem %s6, %s386
        $region44: #{tpu_custom_call.1} parent=15 // pred_fallthru
          _
        // Predicated region
        $region45: #{tpu_custom_call.1} parent=15 // pred_check
          %p388 = pneg %p233
        $region46: #{tpu_custom_call.1} parent=15 // pred_check_branch
          %390 = sbr.rel (%p388) target = $region48
        $region47: #{tpu_custom_call.1} parent=15 // pred_region
          %p391 = scmp.lt.s32.totalorder %s27, 1
          %s392 = scalar_select %p391, %s27, 1
          %s393 = smul.addr %s392, 64
          %s394 = smul.addr %s393, 4
          %s395 = scalar_lea.vmem %s7, %s394
        $region48: #{tpu_custom_call.1} parent=15 // pred_fallthru
          _
        // Predicated region
        $region49: #{tpu_custom_call.1} parent=15 // pred_check
          %p396 = pneg %p259
        $region50: #{tpu_custom_call.1} parent=15 // pred_check_branch
          %398 = sbr.rel (%p396) target = $region52
        $region51: #{tpu_custom_call.1} parent=15 // pred_region
          %p399 = scmp.lt.s32.totalorder %s27, 1
          %s400 = scalar_select %p399, %s27, 1
          %s401 = smul.addr %s400, 48
          %s402 = smul.addr %s401, 4
          %s403 = scalar_lea.vmem %s8, %s402
        $region52: #{tpu_custom_call.1} parent=15 // pred_fallthru
          _
        // Predicated region
        $region53: #{tpu_custom_call.1} parent=15 // pred_check
          %p404 = pneg %p285
        $region54: #{tpu_custom_call.1} parent=15 // pred_check_branch
          %406 = sbr.rel (%p404) target = $region56
        $region55: #{tpu_custom_call.1} parent=15 // pred_region
          %p407 = scmp.lt.s32.totalorder %s27, 1
          %s408 = scalar_select %p407, %s27, 1
          %s409 = scalar_lea.vmem %s9, %s408
        $region56: #{tpu_custom_call.1} parent=15 // pred_fallthru
          _
      $region16: #{tpu_custom_call.1} parent=5 // pred_fallthru
        _
      %p410 = scmp.le.s32.totalorder 1, %s19
      %p411 = scmp.lt.s32.totalorder %s19, 9
      %p412 = pnand %p410, %p411
      %p413 = pneg %p412
      // Predicated region
      $region57: #{tpu_custom_call.1} parent=5 // pred_check
        _
      $region58: #{tpu_custom_call.1} parent=5 // pred_check_branch
        %415 = sbr.rel (%p412) target = $region60
      $region59: #{tpu_custom_call.1} parent=5 // pred_region
        %s416 = ssub.s32 %s19, 1
        %p417 = scmp.lt.s32.totalorder %s28, 3
        %s418 = scalar_select %p417, %s28, 3
        %s419 = smul.addr %s418, 2
        %s420 = smul.addr %s419, 8
        %s421 = scalar_lea.vmem %s0, %s420
        %p422 = pneg %p57
        %p423 = pneg %p54
        %p424 = scmp.lt.s32.totalorder %s28, 3
        %s425 = scalar_select %p424, %s28, 3
        %s426 = smul.addr %s425, 2
        %s427 = smul.addr %s426, 8
        %s428 = scalar_lea.vmem %s1, %s427
        %p429 = pneg %p83
        %p430 = pneg %p80
        %p431 = scmp.lt.s32.totalorder %s28, 3
        %s432 = scalar_select %p431, %s28, 3
        %s433 = smul.addr %s432, 8
        %s434 = scalar_lea.vmem %s2, %s433
        %p435 = pneg %p109
        %p436 = pneg %p106
        %p437 = scmp.lt.s32.totalorder %s28, 3
        %s438 = scalar_select %p437, %s28, 3
        %s439 = smul.addr %s438, 8
        %s440 = scalar_lea.vmem %s3, %s439
        %p441 = pneg %p135
        %p442 = pneg %p132
        %p443 = scmp.lt.s32.totalorder %s28, 3
        %s444 = scalar_select %p443, %s28, 3
        %s445 = scalar_lea.vmem %s4, %s444
        %p446 = pneg %p161
        %p447 = pneg %p158
        %p448 = scmp.lt.s32.totalorder %s29, 1
        %s449 = scalar_select %p448, %s29, 1
        %s450 = smul.addr %s449, 64
        %s451 = smul.addr %s450, 4
        %s452 = scalar_lea.vmem %s5, %s451
        %p453 = pneg %p187
        %p454 = pneg %p184
        %p455 = scmp.lt.s32.totalorder %s29, 1
        %s456 = scalar_select %p455, %s29, 1
        %s457 = smul.addr %s456, 64
        %s458 = smul.addr %s457, 4
        %s459 = scalar_lea.vmem %s6, %s458
        %p460 = pneg %p213
        %p461 = pneg %p210
        %p462 = scmp.lt.s32.totalorder %s29, 1
        %s463 = scalar_select %p462, %s29, 1
        %s464 = smul.addr %s463, 64
        %s465 = smul.addr %s464, 4
        %s466 = scalar_lea.vmem %s7, %s465
        %p467 = pneg %p239
        %p468 = pneg %p236
        %p469 = scmp.lt.s32.totalorder %s29, 1
        %s470 = scalar_select %p469, %s29, 1
        %s471 = smul.addr %s470, 48
        %s472 = smul.addr %s471, 4
        %s473 = scalar_lea.vmem %s8, %s472
        %p474 = pneg %p265
        %p475 = pneg %p262
        %p476 = scmp.lt.s32.totalorder %s29, 1
        %s477 = scalar_select %p476, %s29, 1
        %s478 = scalar_lea.vmem %s9, %s477
        %p479 = pneg %p291
        %p480 = pneg %p288
        %p481 = pneg %p317
        %p482 = pneg %p314
        %s483 = sand.u32 %s304, 1
        %s484 = scalar_lea.sflag [#allocation4], %s483
        %s485 = sand.u32 %s304, 1
        %s486 = smul.addr %s485, 16
        %s487 = scalar_lea.vmem [#allocation3], %s486
        %p488 = scmp.lt.s32.totalorder %s28, 3
        %s489 = scalar_select %p488, %s28, 3
        %s490 = smul.addr %s489, 2
        %s491 = smul.addr %s490, 8
        %s492 = scalar_lea.vmem %s0, %s491
        %p493 = scmp.lt.s32.totalorder %s28, 3
        %s494 = scalar_select %p493, %s28, 3
        %s495 = smul.addr %s494, 2
        %s496 = smul.addr %s495, 8
        %s497 = scalar_lea.vmem %s1, %s496
        %p498 = scmp.lt.s32.totalorder %s28, 3
        %s499 = scalar_select %p498, %s28, 3
        %s500 = smul.addr %s499, 8
        %s501 = scalar_lea.vmem %s2, %s500
        %p502 = scmp.lt.s32.totalorder %s28, 3
        %s503 = scalar_select %p502, %s28, 3
        %s504 = smul.addr %s503, 8
        %s505 = scalar_lea.vmem %s3, %s504
        %p506 = scmp.lt.s32.totalorder %s28, 3
        %s507 = scalar_select %p506, %s28, 3
        %s508 = scalar_lea.vmem %s4, %s507
        %p509 = scmp.lt.s32.totalorder %s29, 1
        %s510 = scalar_select %p509, %s29, 1
        %s511 = smul.addr %s510, 64
        %s512 = smul.addr %s511, 4
        %s513 = scalar_lea.vmem %s5, %s512
        %p514 = scmp.lt.s32.totalorder %s29, 1
        %s515 = scalar_select %p514, %s29, 1
        %s516 = smul.addr %s515, 64
        %s517 = smul.addr %s516, 4
        %s518 = scalar_lea.vmem %s6, %s517
        %p519 = scmp.lt.s32.totalorder %s29, 1
        %s520 = scalar_select %p519, %s29, 1
        %s521 = smul.addr %s520, 64
        %s522 = smul.addr %s521, 4
        %s523 = scalar_lea.vmem %s7, %s522
        %p524 = scmp.lt.s32.totalorder %s29, 1
        %s525 = scalar_select %p524, %s29, 1
        %s526 = smul.addr %s525, 48
        %s527 = smul.addr %s526, 4
        %s528 = scalar_lea.vmem %s8, %s527
        %p529 = scmp.lt.s32.totalorder %s29, 1
        %s530 = scalar_select %p529, %s29, 1
        %s531 = scalar_lea.vmem %s9, %s530
        %p533 = scmp.eq.s32.totalorder %s29, 0
        // Predicated region
        $region61: #{tpu_custom_call.1} parent=59 // pred_check
          %p534 = pneg %p533
        $region62: #{tpu_custom_call.1} parent=59 // pred_check_branch
          %536 = sbr.rel (%p534) target = $region64
        $region63: #{tpu_custom_call.1} parent=59 // pred_region
          %v537 = vld [vmem:[%s492] sm:$0xff]
          %v538 = vld [vmem:[%s492 + $0x8] sm:$0xff]
          %539 = vst [vmem:[#allocation2] sm:$0xff] %v537
          %540 = vst [vmem:[#allocation2 + $0x8] sm:$0xff] %v538
        $region64: #{tpu_custom_call.1} parent=59 // pred_fallthru
          _
        %v541 = vld [vmem:[#allocation2] sm:$0xff]
        %v542 = vld [vmem:[#allocation2 + $0x8] sm:$0xff]
        %v543 = vld [vmem:[%s497] sm:$0xff]
        %v544 = vld [vmem:[%s497 + $0x8] sm:$0xff]
        %v545 = vld [vmem:[%s501] sm:$0xff]
        %v546 = vld [vmem:[%s505] sm:$0xff]
        %v547 = vld [vmem:[%s508] sm:$0x1]
        %vm548 = vcmask 7168
        %v549 = vsel %vm548, %v546, 0.0
        %v550 = vrot.slane %v549, 4
        %v551 = vadd.f32 %v549, %v550
        %v552 = vrot.slane %v551, 2
        %v553 = vadd.f32 %v551, %v552
        %v554 = vrot.slane %v553, 1
        %v555 = vadd.f32 %v553, %v554
        %v556 = vmax.f32 %v555, 1.0
        %v557 = vrcp.pop %v556
        %v558 = vmul.f32 %v556, %v557
        %v559 = vsub.f32 1.0, %v558
        %v560 = vmul.f32 %v557, %v559
        %v561 = vadd.f32 %v557, %v560
        %vm562 = vweird.f32 %v556
        %vm563 = vweird.f32 %v557
        %vm564 = vmor %vm562, %vm563
        %v565 = vsel %vm564, %v557, %v561
        %v566 = vand.u32 2147483647, %v556
        %vm567 = vcmp.eq.f32.partialorder %v566, 8.507059e+37
        %v568 = vand.u32 %v556, 2147483648
        %v569 = vor.u32 1.1754944e-38, %v568
        %v570 = vsel %vm567, %v569, %v565
        %v571 = vmul.f32 1.0, %v570
        %573 = vset.pattern.permute.xlu0 0
        %574 = vperm.xlu0 %573, %v546
        %v575 = vpop.permute.xlu0 %574
        %v577 = vmul.f32 %v545, %v575
        %v578 = vrot.slane %v577, 4
        %v579 = vadd.f32 %v577, %v578
        %v580 = vrot.slane %v579, 2
        %v581 = vadd.f32 %v579, %v580
        %v582 = vrot.slane %v581, 1
        %v583 = vadd.f32 %v581, %v582
        %585 = vset.pattern.permute.xlu0 0
        %586 = vperm.xlu0 %585, %v571
        %v587 = vpop.permute.xlu0 %586
        %v589 = vmul.f32 %v583, %v587
        %v590 = vmul.f32 %v577, %v545
        %v591 = vrot.slane %v590, 4
        %v592 = vadd.f32 %v590, %v591
        %v593 = vrot.slane %v592, 2
        %v594 = vadd.f32 %v592, %v593
        %v595 = vrot.slane %v594, 1
        %v596 = vadd.f32 %v594, %v595
        %v597 = vmul.f32 %v596, %v587
        %v598 = vmul.f32 %v589, %v589
        %v599 = vsub.f32 %v597, %v598
        %v600 = vmax.f32 %v599, 0.0
        %v601 = vsub.f32 %v545, %v589
        %v602 = vadd.f32 %v600, 1e-05
        %v603 = vrsqrt.pop %v602
        %v604 = vmul.f32 %v603, %v602
        %v605 = vmul.f32 %v604, %v603
        %v606 = vmul.f32 0.5, %v605
        %v607 = vsub.f32 1.5, %v606
        %v608 = vmul.f32 %v603, %v607
        %vm609 = vweird.f32 %v602
        %vm610 = vweird.f32 %v603
        %vm611 = vmor %vm609, %vm610
        %v612 = vsel %vm611, %v603, %v608
        %v613 = vmul.f32 %v601, %v612
        %v614 = vmul.f32 %v613, %v575
        %v615 = vpack.c.bf16 %v614, %v614
        %v616 = vpack.c.bf16 %v545, %v545
        %vm617 = vcmp.gt.f32.partialorder %v547, 0.0
        %v618 = vsel %vm617, 0.0, -1e+30
        %v619 = vsel %vm548, %v543, 0.0
        %v620 = vsel %vm548, %v544, 0.0
        %v621 = vadd.f32 %v619, %v620
        %v622 = vrot.slane %v621, 4
        %v623 = vadd.f32 %v621, %v622
        %v624 = vrot.slane %v623, 2
        %v625 = vadd.f32 %v623, %v624
        %v626 = vrot.slane %v625, 1
        %v627 = vadd.f32 %v625, %v626
        %v628 = vmax.f32 %v627, 1.0
        %v629 = vrcp.pop %v628
        %v630 = vmul.f32 %v628, %v629
        %v631 = vsub.f32 1.0, %v630
        %v632 = vmul.f32 %v629, %v631
        %v633 = vadd.f32 %v629, %v632
        %vm634 = vweird.f32 %v628
        %vm635 = vweird.f32 %v629
        %vm636 = vmor %vm634, %vm635
        %v637 = vsel %vm636, %v629, %v633
        %v638 = vand.u32 2147483647, %v628
        %vm639 = vcmp.eq.f32.partialorder %v638, 8.507059e+37
        %v640 = vand.u32 %v628, 2147483648
        %v641 = vor.u32 1.1754944e-38, %v640
        %v642 = vsel %vm639, %v641, %v637
        %v643 = vmul.f32 1.0, %v642
        %645 = vset.pattern.permute.xlu0 0
        %646 = vperm.xlu0 %645, %v543
        %v647 = vpop.permute.xlu0 %646
        %650 = vset.pattern.permute.xlu0 0
        %651 = vperm.xlu0 %650, %v544
        %v652 = vpop.permute.xlu0 %651
        %v654 = vmul.f32 %v541, %v647
        %v655 = vmul.f32 %v542, %v652
        %v656 = vadd.f32 %v654, %v655
        %v657 = vrot.slane %v656, 4
        %v658 = vadd.f32 %v656, %v657
        %v659 = vrot.slane %v658, 2
        %v660 = vadd.f32 %v658, %v659
        %v661 = vrot.slane %v660, 1
        %v662 = vadd.f32 %v660, %v661
        %664 = vset.pattern.permute.xlu0 0
        %665 = vperm.xlu0 %664, %v643
        %v666 = vpop.permute.xlu0 %665
        %v668 = vmul.f32 %v662, %v666
        %v669 = vmul.f32 %v654, %v541
        %v670 = vmul.f32 %v655, %v542
        %v671 = vadd.f32 %v669, %v670
        %v672 = vrot.slane %v671, 4
        %v673 = vadd.f32 %v671, %v672
        %v674 = vrot.slane %v673, 2
        %v675 = vadd.f32 %v673, %v674
        %v676 = vrot.slane %v675, 1
        %v677 = vadd.f32 %v675, %v676
        %v678 = vmul.f32 %v677, %v666
        %v679 = vmul.f32 %v668, %v668
        %v680 = vsub.f32 %v678, %v679
        %v681 = vmax.f32 %v680, 0.0
        %v682 = vsub.f32 %v541, %v668
        %v683 = vsub.f32 %v542, %v668
        %v684 = vadd.f32 %v681, 1e-05
        %v685 = vrsqrt.pop %v684
        %v686 = vmul.f32 %v685, %v684
        %v687 = vmul.f32 %v686, %v685
        %v688 = vmul.f32 0.5, %v687
        %v689 = vsub.f32 1.5, %v688
        %v690 = vmul.f32 %v685, %v689
        %vm691 = vweird.f32 %v684
        %vm692 = vweird.f32 %v685
        %vm693 = vmor %vm691, %vm692
        %v694 = vsel %vm693, %v685, %v690
        %v695 = vmul.f32 %v682, %v694
        %v696 = vmul.f32 %v683, %v694
        %v697 = vmul.f32 %v695, %v647
        %v698 = vmul.f32 %v696, %v652
        %v699 = vpack.c.bf16 %v698, %v697
        %v700 = vld [vmem:[%s513] sm:$0xf]
        %v701 = vld [vmem:[%s513 + $0x4] sm:$0xf]
        %v702 = vld [vmem:[%s513 + $0x8] sm:$0xf]
        %v703 = vld [vmem:[%s513 + $0xc] sm:$0xf]
        %v704 = vld [vmem:[%s513 + $0x10] sm:$0xf]
        %v705 = vld [vmem:[%s513 + $0x14] sm:$0xf]
        %v706 = vld [vmem:[%s513 + $0x18] sm:$0xf]
        %v707 = vld [vmem:[%s513 + $0x1c] sm:$0xf]
        %v708 = vld [vmem:[%s513 + $0x20] sm:$0xf]
        %v709 = vld [vmem:[%s513 + $0x24] sm:$0xf]
        %v710 = vld [vmem:[%s513 + $0x28] sm:$0xf]
        %v711 = vld [vmem:[%s513 + $0x2c] sm:$0xf]
        %v712 = vld [vmem:[%s513 + $0x30] sm:$0xf]
        %v713 = vld [vmem:[%s513 + $0x34] sm:$0xf]
        %v714 = vld [vmem:[%s513 + $0x38] sm:$0xf]
        %v715 = vld [vmem:[%s513 + $0x3c] sm:$0xf]
        %v732 = vunpack.c.l.b16 %v700
        %v733 = vunpack.c.l.b16 %v701
        %v734 = vunpack.c.l.b16 %v702
        %v735 = vunpack.c.l.b16 %v703
        %v736 = vunpack.c.l.b16 %v704
        %v737 = vunpack.c.l.b16 %v705
        %v738 = vunpack.c.l.b16 %v706
        %v739 = vunpack.c.l.b16 %v707
        %v740 = vunpack.c.l.b16 %v708
        %v741 = vunpack.c.l.b16 %v709
        %v742 = vunpack.c.l.b16 %v710
        %v743 = vunpack.c.l.b16 %v711
        %v744 = vunpack.c.l.b16 %v712
        %v745 = vunpack.c.l.b16 %v713
        %v746 = vunpack.c.l.b16 %v714
        %v747 = vunpack.c.l.b16 %v715
        %v748 = vpack.c.b16 %v733, %v732
        %v749 = vpack.c.b16 %v735, %v734
        %v750 = vpack.c.b16 %v737, %v736
        %v751 = vpack.c.b16 %v739, %v738
        %v752 = vpack.c.b16 %v741, %v740
        %v753 = vpack.c.b16 %v743, %v742
        %v754 = vpack.c.b16 %v745, %v744
        %v755 = vpack.c.b16 %v747, %v746
        %764 = vmatpush.bf16.msra.mxu0 %v755
        %765 = vmatpush.bf16.msra.mxu0 %v754
        %766 = vmatpush.bf16.msra.mxu0 %v753
        %767 = vmatpush.bf16.msra.mxu0 %v752
        %768 = vmatpush.bf16.msra.mxu0 %v751
        %769 = vmatpush.bf16.msra.mxu0 %v750
        %770 = vmatpush.bf16.msra.mxu0 %v749
        %771 = vmatpush.bf16.msra.mxu0 %v748
        %772 = vmatmul.bf16.gmra.mxu0 %v699
        %v773 = vpop.f32.mrf.mxu0
        %v774 = vadd.f32 0.0, %v773
        %v775 = vpop.f32.mrf.mxu0
        %v776 = vadd.f32 0.0, %v775
        %777 = vdwg.mxu0
        %s778 = scalar_lea.vmem %s513, 64
        %v779 = vld [vmem:[%s778] sm:$0xf]
        %v780 = vld [vmem:[%s778 + $0x4] sm:$0xf]
        %v781 = vld [vmem:[%s778 + $0x8] sm:$0xf]
        %v782 = vld [vmem:[%s778 + $0xc] sm:$0xf]
        %v783 = vld [vmem:[%s778 + $0x10] sm:$0xf]
        %v784 = vld [vmem:[%s778 + $0x14] sm:$0xf]
        %v785 = vld [vmem:[%s778 + $0x18] sm:$0xf]
        %v786 = vld [vmem:[%s778 + $0x1c] sm:$0xf]
        %v787 = vld [vmem:[%s778 + $0x20] sm:$0xf]
        %v788 = vld [vmem:[%s778 + $0x24] sm:$0xf]
        %v789 = vld [vmem:[%s778 + $0x28] sm:$0xf]
        %v790 = vld [vmem:[%s778 + $0x2c] sm:$0xf]
        %v791 = vld [vmem:[%s778 + $0x30] sm:$0xf]
        %v792 = vld [vmem:[%s778 + $0x34] sm:$0xf]
        %v793 = vld [vmem:[%s778 + $0x38] sm:$0xf]
        %v794 = vld [vmem:[%s778 + $0x3c] sm:$0xf]
        %v811 = vunpack.c.l.b16 %v779
        %v812 = vunpack.c.l.b16 %v780
        %v813 = vunpack.c.l.b16 %v781
        %v814 = vunpack.c.l.b16 %v782
        %v815 = vunpack.c.l.b16 %v783
        %v816 = vunpack.c.l.b16 %v784
        %v817 = vunpack.c.l.b16 %v785
        %v818 = vunpack.c.l.b16 %v786
        %v819 = vunpack.c.l.b16 %v787
        %v820 = vunpack.c.l.b16 %v788
        %v821 = vunpack.c.l.b16 %v789
        %v822 = vunpack.c.l.b16 %v790
        %v823 = vunpack.c.l.b16 %v791
        %v824 = vunpack.c.l.b16 %v792
        %v825 = vunpack.c.l.b16 %v793
        %v826 = vunpack.c.l.b16 %v794
        %v827 = vpack.c.b16 %v812, %v811
        %v828 = vpack.c.b16 %v814, %v813
        %v829 = vpack.c.b16 %v816, %v815
        %v830 = vpack.c.b16 %v818, %v817
        %v831 = vpack.c.b16 %v820, %v819
        %v832 = vpack.c.b16 %v822, %v821
        %v833 = vpack.c.b16 %v824, %v823
        %v834 = vpack.c.b16 %v826, %v825
        %843 = vmatpush.bf16.msra.mxu0 %v834
        %844 = vmatpush.bf16.msra.mxu0 %v833
        %845 = vmatpush.bf16.msra.mxu0 %v832
        %846 = vmatpush.bf16.msra.mxu0 %v831
        %847 = vmatpush.bf16.msra.mxu0 %v830
        %848 = vmatpush.bf16.msra.mxu0 %v829
        %849 = vmatpush.bf16.msra.mxu0 %v828
        %850 = vmatpush.bf16.msra.mxu0 %v827
        %851 = vmatmul.bf16.gmra.mxu0 %v699
        %v852 = vpop.f32.mrf.mxu0
        %v853 = vadd.f32 0.0, %v852
        %v854 = vpop.f32.mrf.mxu0
        %v855 = vadd.f32 0.0, %v854
        %856 = vdwg.mxu0
        %s857 = scalar_lea.vmem %s513, 128
        %v858 = vld [vmem:[%s857] sm:$0xf]
        %v859 = vld [vmem:[%s857 + $0x4] sm:$0xf]
        %v860 = vld [vmem:[%s857 + $0x8] sm:$0xf]
        %v861 = vld [vmem:[%s857 + $0xc] sm:$0xf]
        %v862 = vld [vmem:[%s857 + $0x10] sm:$0xf]
        %v863 = vld [vmem:[%s857 + $0x14] sm:$0xf]
        %v864 = vld [vmem:[%s857 + $0x18] sm:$0xf]
        %v865 = vld [vmem:[%s857 + $0x1c] sm:$0xf]
        %v866 = vld [vmem:[%s857 + $0x20] sm:$0xf]
        %v867 = vld [vmem:[%s857 + $0x24] sm:$0xf]
        %v868 = vld [vmem:[%s857 + $0x28] sm:$0xf]
        %v869 = vld [vmem:[%s857 + $0x2c] sm:$0xf]
        %v870 = vld [vmem:[%s857 + $0x30] sm:$0xf]
        %v871 = vld [vmem:[%s857 + $0x34] sm:$0xf]
        %v872 = vld [vmem:[%s857 + $0x38] sm:$0xf]
        %v873 = vld [vmem:[%s857 + $0x3c] sm:$0xf]
        %v890 = vunpack.c.l.b16 %v858
        %v891 = vunpack.c.l.b16 %v859
        %v892 = vunpack.c.l.b16 %v860
        %v893 = vunpack.c.l.b16 %v861
        %v894 = vunpack.c.l.b16 %v862
        %v895 = vunpack.c.l.b16 %v863
        %v896 = vunpack.c.l.b16 %v864
        %v897 = vunpack.c.l.b16 %v865
        %v898 = vunpack.c.l.b16 %v866
        %v899 = vunpack.c.l.b16 %v867
        %v900 = vunpack.c.l.b16 %v868
        %v901 = vunpack.c.l.b16 %v869
        %v902 = vunpack.c.l.b16 %v870
        %v903 = vunpack.c.l.b16 %v871
        %v904 = vunpack.c.l.b16 %v872
        %v905 = vunpack.c.l.b16 %v873
        %v906 = vpack.c.b16 %v891, %v890
        %v907 = vpack.c.b16 %v893, %v892
        %v908 = vpack.c.b16 %v895, %v894
        %v909 = vpack.c.b16 %v897, %v896
        %v910 = vpack.c.b16 %v899, %v898
        %v911 = vpack.c.b16 %v901, %v900
        %v912 = vpack.c.b16 %v903, %v902
        %v913 = vpack.c.b16 %v905, %v904
        %922 = vmatpush.bf16.msra.mxu0 %v913
        %923 = vmatpush.bf16.msra.mxu0 %v912
        %924 = vmatpush.bf16.msra.mxu0 %v911
        %925 = vmatpush.bf16.msra.mxu0 %v910
        %926 = vmatpush.bf16.msra.mxu0 %v909
        %927 = vmatpush.bf16.msra.mxu0 %v908
        %928 = vmatpush.bf16.msra.mxu0 %v907
        %929 = vmatpush.bf16.msra.mxu0 %v906
        %930 = vmatmul.bf16.gmra.mxu0 %v699
        %v931 = vpop.f32.mrf.mxu0
        %v932 = vadd.f32 0.0, %v931
        %v933 = vpop.f32.mrf.mxu0
        %v934 = vadd.f32 0.0, %v933
        %935 = vdwg.mxu0
        %s936 = scalar_lea.vmem %s513, 192
        %v937 = vld [vmem:[%s936] sm:$0xf]
        %v938 = vld [vmem:[%s936 + $0x4] sm:$0xf]
        %v939 = vld [vmem:[%s936 + $0x8] sm:$0xf]
        %v940 = vld [vmem:[%s936 + $0xc] sm:$0xf]
        %v941 = vld [vmem:[%s936 + $0x10] sm:$0xf]
        %v942 = vld [vmem:[%s936 + $0x14] sm:$0xf]
        %v943 = vld [vmem:[%s936 + $0x18] sm:$0xf]
        %v944 = vld [vmem:[%s936 + $0x1c] sm:$0xf]
        %v945 = vld [vmem:[%s936 + $0x20] sm:$0xf]
        %v946 = vld [vmem:[%s936 + $0x24] sm:$0xf]
        %v947 = vld [vmem:[%s936 + $0x28] sm:$0xf]
        %v948 = vld [vmem:[%s936 + $0x2c] sm:$0xf]
        %v949 = vld [vmem:[%s936 + $0x30] sm:$0xf]
        %v950 = vld [vmem:[%s936 + $0x34] sm:$0xf]
        %v951 = vld [vmem:[%s936 + $0x38] sm:$0xf]
        %v952 = vld [vmem:[%s936 + $0x3c] sm:$0xf]
        %v969 = vunpack.c.l.b16 %v937
        %v970 = vunpack.c.l.b16 %v938
        %v971 = vunpack.c.l.b16 %v939
        %v972 = vunpack.c.l.b16 %v940
        %v973 = vunpack.c.l.b16 %v941
        %v974 = vunpack.c.l.b16 %v942
        %v975 = vunpack.c.l.b16 %v943
        %v976 = vunpack.c.l.b16 %v944
        %v977 = vunpack.c.l.b16 %v945
        %v978 = vunpack.c.l.b16 %v946
        %v979 = vunpack.c.l.b16 %v947
        %v980 = vunpack.c.l.b16 %v948
        %v981 = vunpack.c.l.b16 %v949
        %v982 = vunpack.c.l.b16 %v950
        %v983 = vunpack.c.l.b16 %v951
        %v984 = vunpack.c.l.b16 %v952
        %v985 = vpack.c.b16 %v970, %v969
        %v986 = vpack.c.b16 %v972, %v971
        %v987 = vpack.c.b16 %v974, %v973
        %v988 = vpack.c.b16 %v976, %v975
        %v989 = vpack.c.b16 %v978, %v977
        %v990 = vpack.c.b16 %v980, %v979
        %v991 = vpack.c.b16 %v982, %v981
        %v992 = vpack.c.b16 %v984, %v983
        %1001 = vmatpush.bf16.msra.mxu0 %v992
        %1002 = vmatpush.bf16.msra.mxu0 %v991
        %1003 = vmatpush.bf16.msra.mxu0 %v990
        %1004 = vmatpush.bf16.msra.mxu0 %v989
        %1005 = vmatpush.bf16.msra.mxu0 %v988
        %1006 = vmatpush.bf16.msra.mxu0 %v987
        %1007 = vmatpush.bf16.msra.mxu0 %v986
        %1008 = vmatpush.bf16.msra.mxu0 %v985
        %1009 = vmatmul.bf16.gmra.mxu0 %v699
        %v1010 = vpop.f32.mrf.mxu0
        %v1011 = vadd.f32 0.0, %v1010
        %v1012 = vpop.f32.mrf.mxu0
        %v1013 = vadd.f32 0.0, %v1012
        %1014 = vdwg.mxu0
        %v1015 = vpack.c.bf16 %v774, %v774
        %v1016 = vpack.c.bf16 %v776, %v776
        %v1017 = vpack.c.bf16 %v853, %v853
        %v1018 = vpack.c.bf16 %v855, %v855
        %v1019 = vpack.c.bf16 %v932, %v932
        %v1020 = vpack.c.bf16 %v934, %v934
        %v1021 = vpack.c.bf16 %v1011, %v1011
        %v1022 = vpack.c.bf16 %v1013, %v1013
        %v1023 = vld [vmem:[%s518] sm:$0xf]
        %v1024 = vld [vmem:[%s518 + $0x4] sm:$0xf]
        %v1025 = vld [vmem:[%s518 + $0x8] sm:$0xf]
        %v1026 = vld [vmem:[%s518 + $0xc] sm:$0xf]
        %v1027 = vld [vmem:[%s518 + $0x10] sm:$0xf]
        %v1028 = vld [vmem:[%s518 + $0x14] sm:$0xf]
        %v1029 = vld [vmem:[%s518 + $0x18] sm:$0xf]
        %v1030 = vld [vmem:[%s518 + $0x1c] sm:$0xf]
        %v1031 = vld [vmem:[%s518 + $0x20] sm:$0xf]
        %v1032 = vld [vmem:[%s518 + $0x24] sm:$0xf]
        %v1033 = vld [vmem:[%s518 + $0x28] sm:$0xf]
        %v1034 = vld [vmem:[%s518 + $0x2c] sm:$0xf]
        %v1035 = vld [vmem:[%s518 + $0x30] sm:$0xf]
        %v1036 = vld [vmem:[%s518 + $0x34] sm:$0xf]
        %v1037 = vld [vmem:[%s518 + $0x38] sm:$0xf]
        %v1038 = vld [vmem:[%s518 + $0x3c] sm:$0xf]
        %v1055 = vunpack.c.l.b16 %v1023
        %v1056 = vunpack.c.l.b16 %v1024
        %v1057 = vunpack.c.l.b16 %v1025
        %v1058 = vunpack.c.l.b16 %v1026
        %v1059 = vunpack.c.l.b16 %v1027
        %v1060 = vunpack.c.l.b16 %v1028
        %v1061 = vunpack.c.l.b16 %v1029
        %v1062 = vunpack.c.l.b16 %v1030
        %v1063 = vunpack.c.l.b16 %v1031
        %v1064 = vunpack.c.l.b16 %v1032
        %v1065 = vunpack.c.l.b16 %v1033
        %v1066 = vunpack.c.l.b16 %v1034
        %v1067 = vunpack.c.l.b16 %v1035
        %v1068 = vunpack.c.l.b16 %v1036
        %v1069 = vunpack.c.l.b16 %v1037
        %v1070 = vunpack.c.l.b16 %v1038
        %v1071 = vpack.c.b16 %v1056, %v1055
        %v1072 = vpack.c.b16 %v1058, %v1057
        %v1073 = vpack.c.b16 %v1060, %v1059
        %v1074 = vpack.c.b16 %v1062, %v1061
        %v1075 = vpack.c.b16 %v1064, %v1063
        %v1076 = vpack.c.b16 %v1066, %v1065
        %v1077 = vpack.c.b16 %v1068, %v1067
        %v1078 = vpack.c.b16 %v1070, %v1069
        %1087 = vmatpush.bf16.msra.mxu0 %v1078
        %1088 = vmatpush.bf16.msra.mxu0 %v1077
        %1089 = vmatpush.bf16.msra.mxu0 %v1076
        %1090 = vmatpush.bf16.msra.mxu0 %v1075
        %1091 = vmatpush.bf16.msra.mxu0 %v1074
        %1092 = vmatpush.bf16.msra.mxu0 %v1073
        %1093 = vmatpush.bf16.msra.mxu0 %v1072
        %1094 = vmatpush.bf16.msra.mxu0 %v1071
        %1095 = vmatmul.bf16.gmra.mxu0 %v615
        %v1096 = vpop.f32.mrf.mxu0
        %v1097 = vadd.f32 0.0, %v1096
        %v1098 = vpop.f32.mrf.mxu0
        %1099 = vdwg.mxu0
        %s1100 = scalar_lea.vmem %s518, 64
        %v1101 = vld [vmem:[%s1100] sm:$0xf]
        %v1102 = vld [vmem:[%s1100 + $0x4] sm:$0xf]
        %v1103 = vld [vmem:[%s1100 + $0x8] sm:$0xf]
        %v1104 = vld [vmem:[%s1100 + $0xc] sm:$0xf]
        %v1105 = vld [vmem:[%s1100 + $0x10] sm:$0xf]
        %v1106 = vld [vmem:[%s1100 + $0x14] sm:$0xf]
        %v1107 = vld [vmem:[%s1100 + $0x18] sm:$0xf]
        %v1108 = vld [vmem:[%s1100 + $0x1c] sm:$0xf]
        %v1109 = vld [vmem:[%s1100 + $0x20] sm:$0xf]
        %v1110 = vld [vmem:[%s1100 + $0x24] sm:$0xf]
        %v1111 = vld [vmem:[%s1100 + $0x28] sm:$0xf]
        %v1112 = vld [vmem:[%s1100 + $0x2c] sm:$0xf]
        %v1113 = vld [vmem:[%s1100 + $0x30] sm:$0xf]
        %v1114 = vld [vmem:[%s1100 + $0x34] sm:$0xf]
        %v1115 = vld [vmem:[%s1100 + $0x38] sm:$0xf]
        %v1116 = vld [vmem:[%s1100 + $0x3c] sm:$0xf]
        %v1133 = vunpack.c.l.b16 %v1101
        %v1134 = vunpack.c.l.b16 %v1102
        %v1135 = vunpack.c.l.b16 %v1103
        %v1136 = vunpack.c.l.b16 %v1104
        %v1137 = vunpack.c.l.b16 %v1105
        %v1138 = vunpack.c.l.b16 %v1106
        %v1139 = vunpack.c.l.b16 %v1107
        %v1140 = vunpack.c.l.b16 %v1108
        %v1141 = vunpack.c.l.b16 %v1109
        %v1142 = vunpack.c.l.b16 %v1110
        %v1143 = vunpack.c.l.b16 %v1111
        %v1144 = vunpack.c.l.b16 %v1112
        %v1145 = vunpack.c.l.b16 %v1113
        %v1146 = vunpack.c.l.b16 %v1114
        %v1147 = vunpack.c.l.b16 %v1115
        %v1148 = vunpack.c.l.b16 %v1116
        %v1149 = vpack.c.b16 %v1134, %v1133
        %v1150 = vpack.c.b16 %v1136, %v1135
        %v1151 = vpack.c.b16 %v1138, %v1137
        %v1152 = vpack.c.b16 %v1140, %v1139
        %v1153 = vpack.c.b16 %v1142, %v1141
        %v1154 = vpack.c.b16 %v1144, %v1143
        %v1155 = vpack.c.b16 %v1146, %v1145
        %v1156 = vpack.c.b16 %v1148, %v1147
        %1165 = vmatpush.bf16.msra.mxu0 %v1156
        %1166 = vmatpush.bf16.msra.mxu0 %v1155
        %1167 = vmatpush.bf16.msra.mxu0 %v1154
        %1168 = vmatpush.bf16.msra.mxu0 %v1153
        %1169 = vmatpush.bf16.msra.mxu0 %v1152
        %1170 = vmatpush.bf16.msra.mxu0 %v1151
        %1171 = vmatpush.bf16.msra.mxu0 %v1150
        %1172 = vmatpush.bf16.msra.mxu0 %v1149
        %1173 = vmatmul.bf16.gmra.mxu0 %v615
        %v1174 = vpop.f32.mrf.mxu0
        %v1175 = vadd.f32 0.0, %v1174
        %v1176 = vpop.f32.mrf.mxu0
        %1177 = vdwg.mxu0
        %s1178 = scalar_lea.vmem %s518, 128
        %v1179 = vld [vmem:[%s1178] sm:$0xf]
        %v1180 = vld [vmem:[%s1178 + $0x4] sm:$0xf]
        %v1181 = vld [vmem:[%s1178 + $0x8] sm:$0xf]
        %v1182 = vld [vmem:[%s1178 + $0xc] sm:$0xf]
        %v1183 = vld [vmem:[%s1178 + $0x10] sm:$0xf]
        %v1184 = vld [vmem:[%s1178 + $0x14] sm:$0xf]
        %v1185 = vld [vmem:[%s1178 + $0x18] sm:$0xf]
        %v1186 = vld [vmem:[%s1178 + $0x1c] sm:$0xf]
        %v1187 = vld [vmem:[%s1178 + $0x20] sm:$0xf]
        %v1188 = vld [vmem:[%s1178 + $0x24] sm:$0xf]
        %v1189 = vld [vmem:[%s1178 + $0x28] sm:$0xf]
        %v1190 = vld [vmem:[%s1178 + $0x2c] sm:$0xf]
        %v1191 = vld [vmem:[%s1178 + $0x30] sm:$0xf]
        %v1192 = vld [vmem:[%s1178 + $0x34] sm:$0xf]
        %v1193 = vld [vmem:[%s1178 + $0x38] sm:$0xf]
        %v1194 = vld [vmem:[%s1178 + $0x3c] sm:$0xf]
        %v1211 = vunpack.c.l.b16 %v1179
        %v1212 = vunpack.c.l.b16 %v1180
        %v1213 = vunpack.c.l.b16 %v1181
        %v1214 = vunpack.c.l.b16 %v1182
        %v1215 = vunpack.c.l.b16 %v1183
        %v1216 = vunpack.c.l.b16 %v1184
        %v1217 = vunpack.c.l.b16 %v1185
        %v1218 = vunpack.c.l.b16 %v1186
        %v1219 = vunpack.c.l.b16 %v1187
        %v1220 = vunpack.c.l.b16 %v1188
        %v1221 = vunpack.c.l.b16 %v1189
        %v1222 = vunpack.c.l.b16 %v1190
        %v1223 = vunpack.c.l.b16 %v1191
        %v1224 = vunpack.c.l.b16 %v1192
        %v1225 = vunpack.c.l.b16 %v1193
        %v1226 = vunpack.c.l.b16 %v1194
        %v1227 = vpack.c.b16 %v1212, %v1211
        %v1228 = vpack.c.b16 %v1214, %v1213
        %v1229 = vpack.c.b16 %v1216, %v1215
        %v1230 = vpack.c.b16 %v1218, %v1217
        %v1231 = vpack.c.b16 %v1220, %v1219
        %v1232 = vpack.c.b16 %v1222, %v1221
        %v1233 = vpack.c.b16 %v1224, %v1223
        %v1234 = vpack.c.b16 %v1226, %v1225
        %1243 = vmatpush.bf16.msra.mxu0 %v1234
        %1244 = vmatpush.bf16.msra.mxu0 %v1233
        %1245 = vmatpush.bf16.msra.mxu0 %v1232
        %1246 = vmatpush.bf16.msra.mxu0 %v1231
        %1247 = vmatpush.bf16.msra.mxu0 %v1230
        %1248 = vmatpush.bf16.msra.mxu0 %v1229
        %1249 = vmatpush.bf16.msra.mxu0 %v1228
        %1250 = vmatpush.bf16.msra.mxu0 %v1227
        %1251 = vmatmul.bf16.gmra.mxu0 %v615
        %v1252 = vpop.f32.mrf.mxu0
        %v1253 = vadd.f32 0.0, %v1252
        %v1254 = vpop.f32.mrf.mxu0
        %1255 = vdwg.mxu0
        %s1256 = scalar_lea.vmem %s518, 192
        %v1257 = vld [vmem:[%s1256] sm:$0xf]
        %v1258 = vld [vmem:[%s1256 + $0x4] sm:$0xf]
        %v1259 = vld [vmem:[%s1256 + $0x8] sm:$0xf]
        %v1260 = vld [vmem:[%s1256 + $0xc] sm:$0xf]
        %v1261 = vld [vmem:[%s1256 + $0x10] sm:$0xf]
        %v1262 = vld [vmem:[%s1256 + $0x14] sm:$0xf]
        %v1263 = vld [vmem:[%s1256 + $0x18] sm:$0xf]
        %v1264 = vld [vmem:[%s1256 + $0x1c] sm:$0xf]
        %v1265 = vld [vmem:[%s1256 + $0x20] sm:$0xf]
        %v1266 = vld [vmem:[%s1256 + $0x24] sm:$0xf]
        %v1267 = vld [vmem:[%s1256 + $0x28] sm:$0xf]
        %v1268 = vld [vmem:[%s1256 + $0x2c] sm:$0xf]
        %v1269 = vld [vmem:[%s1256 + $0x30] sm:$0xf]
        %v1270 = vld [vmem:[%s1256 + $0x34] sm:$0xf]
        %v1271 = vld [vmem:[%s1256 + $0x38] sm:$0xf]
        %v1272 = vld [vmem:[%s1256 + $0x3c] sm:$0xf]
        %v1289 = vunpack.c.l.b16 %v1257
        %v1290 = vunpack.c.l.b16 %v1258
        %v1291 = vunpack.c.l.b16 %v1259
        %v1292 = vunpack.c.l.b16 %v1260
        %v1293 = vunpack.c.l.b16 %v1261
        %v1294 = vunpack.c.l.b16 %v1262
        %v1295 = vunpack.c.l.b16 %v1263
        %v1296 = vunpack.c.l.b16 %v1264
        %v1297 = vunpack.c.l.b16 %v1265
        %v1298 = vunpack.c.l.b16 %v1266
        %v1299 = vunpack.c.l.b16 %v1267
        %v1300 = vunpack.c.l.b16 %v1268
        %v1301 = vunpack.c.l.b16 %v1269
        %v1302 = vunpack.c.l.b16 %v1270
        %v1303 = vunpack.c.l.b16 %v1271
        %v1304 = vunpack.c.l.b16 %v1272
        %v1305 = vpack.c.b16 %v1290, %v1289
        %v1306 = vpack.c.b16 %v1292, %v1291
        %v1307 = vpack.c.b16 %v1294, %v1293
        %v1308 = vpack.c.b16 %v1296, %v1295
        %v1309 = vpack.c.b16 %v1298, %v1297
        %v1310 = vpack.c.b16 %v1300, %v1299
        %v1311 = vpack.c.b16 %v1302, %v1301
        %v1312 = vpack.c.b16 %v1304, %v1303
        %1321 = vmatpush.bf16.msra.mxu0 %v1312
        %1322 = vmatpush.bf16.msra.mxu0 %v1311
        %1323 = vmatpush.bf16.msra.mxu0 %v1310
        %1324 = vmatpush.bf16.msra.mxu0 %v1309
        %1325 = vmatpush.bf16.msra.mxu0 %v1308
        %1326 = vmatpush.bf16.msra.mxu0 %v1307
        %1327 = vmatpush.bf16.msra.mxu0 %v1306
        %1328 = vmatpush.bf16.msra.mxu0 %v1305
        %1329 = vmatmul.bf16.gmra.mxu0 %v615
        %v1330 = vpop.f32.mrf.mxu0
        %v1331 = vadd.f32 0.0, %v1330
        %v1332 = vpop.f32.mrf.mxu0
        %1333 = vdwg.mxu0
        %v1334 = vpack.c.bf16 %v1097, %v1097
        %v1335 = vpack.c.bf16 %v1175, %v1175
        %v1336 = vpack.c.bf16 %v1253, %v1253
        %v1337 = vpack.c.bf16 %v1331, %v1331
        %v1338 = vld [vmem:[%s523] sm:$0xf]
        %v1339 = vld [vmem:[%s523 + $0x4] sm:$0xf]
        %v1340 = vld [vmem:[%s523 + $0x8] sm:$0xf]
        %v1341 = vld [vmem:[%s523 + $0xc] sm:$0xf]
        %v1342 = vld [vmem:[%s523 + $0x10] sm:$0xf]
        %v1343 = vld [vmem:[%s523 + $0x14] sm:$0xf]
        %v1344 = vld [vmem:[%s523 + $0x18] sm:$0xf]
        %v1345 = vld [vmem:[%s523 + $0x1c] sm:$0xf]
        %v1346 = vld [vmem:[%s523 + $0x20] sm:$0xf]
        %v1347 = vld [vmem:[%s523 + $0x24] sm:$0xf]
        %v1348 = vld [vmem:[%s523 + $0x28] sm:$0xf]
        %v1349 = vld [vmem:[%s523 + $0x2c] sm:$0xf]
        %v1350 = vld [vmem:[%s523 + $0x30] sm:$0xf]
        %v1351 = vld [vmem:[%s523 + $0x34] sm:$0xf]
        %v1352 = vld [vmem:[%s523 + $0x38] sm:$0xf]
        %v1353 = vld [vmem:[%s523 + $0x3c] sm:$0xf]
        %v1370 = vunpack.c.l.b16 %v1338
        %v1371 = vunpack.c.l.b16 %v1339
        %v1372 = vunpack.c.l.b16 %v1340
        %v1373 = vunpack.c.l.b16 %v1341
        %v1374 = vunpack.c.l.b16 %v1342
        %v1375 = vunpack.c.l.b16 %v1343
        %v1376 = vunpack.c.l.b16 %v1344
        %v1377 = vunpack.c.l.b16 %v1345
        %v1378 = vunpack.c.l.b16 %v1346
        %v1379 = vunpack.c.l.b16 %v1347
        %v1380 = vunpack.c.l.b16 %v1348
        %v1381 = vunpack.c.l.b16 %v1349
        %v1382 = vunpack.c.l.b16 %v1350
        %v1383 = vunpack.c.l.b16 %v1351
        %v1384 = vunpack.c.l.b16 %v1352
        %v1385 = vunpack.c.l.b16 %v1353
        %v1386 = vpack.c.b16 %v1371, %v1370
        %v1387 = vpack.c.b16 %v1373, %v1372
        %v1388 = vpack.c.b16 %v1375, %v1374
        %v1389 = vpack.c.b16 %v1377, %v1376
        %v1390 = vpack.c.b16 %v1379, %v1378
        %v1391 = vpack.c.b16 %v1381, %v1380
        %v1392 = vpack.c.b16 %v1383, %v1382
        %v1393 = vpack.c.b16 %v1385, %v1384
        %1402 = vmatpush.bf16.msra.mxu0 %v1393
        %1403 = vmatpush.bf16.msra.mxu0 %v1392
        %1404 = vmatpush.bf16.msra.mxu0 %v1391
        %1405 = vmatpush.bf16.msra.mxu0 %v1390
        %1406 = vmatpush.bf16.msra.mxu0 %v1389
        %1407 = vmatpush.bf16.msra.mxu0 %v1388
        %1408 = vmatpush.bf16.msra.mxu0 %v1387
        %1409 = vmatpush.bf16.msra.mxu0 %v1386
        %1410 = vmatmul.bf16.gmra.mxu0 %v616
        %v1411 = vpop.f32.mrf.mxu0
        %v1412 = vadd.f32 0.0, %v1411
        %v1413 = vpop.f32.mrf.mxu0
        %1414 = vdwg.mxu0
        %s1415 = scalar_lea.vmem %s523, 64
        %v1416 = vld [vmem:[%s1415] sm:$0xf]
        %v1417 = vld [vmem:[%s1415 + $0x4] sm:$0xf]
        %v1418 = vld [vmem:[%s1415 + $0x8] sm:$0xf]
        %v1419 = vld [vmem:[%s1415 + $0xc] sm:$0xf]
        %v1420 = vld [vmem:[%s1415 + $0x10] sm:$0xf]
        %v1421 = vld [vmem:[%s1415 + $0x14] sm:$0xf]
        %v1422 = vld [vmem:[%s1415 + $0x18] sm:$0xf]
        %v1423 = vld [vmem:[%s1415 + $0x1c] sm:$0xf]
        %v1424 = vld [vmem:[%s1415 + $0x20] sm:$0xf]
        %v1425 = vld [vmem:[%s1415 + $0x24] sm:$0xf]
        %v1426 = vld [vmem:[%s1415 + $0x28] sm:$0xf]
        %v1427 = vld [vmem:[%s1415 + $0x2c] sm:$0xf]
        %v1428 = vld [vmem:[%s1415 + $0x30] sm:$0xf]
        %v1429 = vld [vmem:[%s1415 + $0x34] sm:$0xf]
        %v1430 = vld [vmem:[%s1415 + $0x38] sm:$0xf]
        %v1431 = vld [vmem:[%s1415 + $0x3c] sm:$0xf]
        %v1448 = vunpack.c.l.b16 %v1416
        %v1449 = vunpack.c.l.b16 %v1417
        %v1450 = vunpack.c.l.b16 %v1418
        %v1451 = vunpack.c.l.b16 %v1419
        %v1452 = vunpack.c.l.b16 %v1420
        %v1453 = vunpack.c.l.b16 %v1421
        %v1454 = vunpack.c.l.b16 %v1422
        %v1455 = vunpack.c.l.b16 %v1423
        %v1456 = vunpack.c.l.b16 %v1424
        %v1457 = vunpack.c.l.b16 %v1425
        %v1458 = vunpack.c.l.b16 %v1426
        %v1459 = vunpack.c.l.b16 %v1427
        %v1460 = vunpack.c.l.b16 %v1428
        %v1461 = vunpack.c.l.b16 %v1429
        %v1462 = vunpack.c.l.b16 %v1430
        %v1463 = vunpack.c.l.b16 %v1431
        %v1464 = vpack.c.b16 %v1449, %v1448
        %v1465 = vpack.c.b16 %v1451, %v1450
        %v1466 = vpack.c.b16 %v1453, %v1452
        %v1467 = vpack.c.b16 %v1455, %v1454
        %v1468 = vpack.c.b16 %v1457, %v1456
        %v1469 = vpack.c.b16 %v1459, %v1458
        %v1470 = vpack.c.b16 %v1461, %v1460
        %v1471 = vpack.c.b16 %v1463, %v1462
        %1480 = vmatpush.bf16.msra.mxu0 %v1471
        %1481 = vmatpush.bf16.msra.mxu0 %v1470
        %1482 = vmatpush.bf16.msra.mxu0 %v1469
        %1483 = vmatpush.bf16.msra.mxu0 %v1468
        %1484 = vmatpush.bf16.msra.mxu0 %v1467
        %1485 = vmatpush.bf16.msra.mxu0 %v1466
        %1486 = vmatpush.bf16.msra.mxu0 %v1465
        %1487 = vmatpush.bf16.msra.mxu0 %v1464
        %1488 = vmatmul.bf16.gmra.mxu0 %v616
        %v1489 = vpop.f32.mrf.mxu0
        %v1490 = vadd.f32 0.0, %v1489
        %v1491 = vpop.f32.mrf.mxu0
        %1492 = vdwg.mxu0
        %s1493 = scalar_lea.vmem %s523, 128
        %v1494 = vld [vmem:[%s1493] sm:$0xf]
        %v1495 = vld [vmem:[%s1493 + $0x4] sm:$0xf]
        %v1496 = vld [vmem:[%s1493 + $0x8] sm:$0xf]
        %v1497 = vld [vmem:[%s1493 + $0xc] sm:$0xf]
        %v1498 = vld [vmem:[%s1493 + $0x10] sm:$0xf]
        %v1499 = vld [vmem:[%s1493 + $0x14] sm:$0xf]
        %v1500 = vld [vmem:[%s1493 + $0x18] sm:$0xf]
        %v1501 = vld [vmem:[%s1493 + $0x1c] sm:$0xf]
        %v1502 = vld [vmem:[%s1493 + $0x20] sm:$0xf]
        %v1503 = vld [vmem:[%s1493 + $0x24] sm:$0xf]
        %v1504 = vld [vmem:[%s1493 + $0x28] sm:$0xf]
        %v1505 = vld [vmem:[%s1493 + $0x2c] sm:$0xf]
        %v1506 = vld [vmem:[%s1493 + $0x30] sm:$0xf]
        %v1507 = vld [vmem:[%s1493 + $0x34] sm:$0xf]
        %v1508 = vld [vmem:[%s1493 + $0x38] sm:$0xf]
        %v1509 = vld [vmem:[%s1493 + $0x3c] sm:$0xf]
        %v1526 = vunpack.c.l.b16 %v1494
        %v1527 = vunpack.c.l.b16 %v1495
        %v1528 = vunpack.c.l.b16 %v1496
        %v1529 = vunpack.c.l.b16 %v1497
        %v1530 = vunpack.c.l.b16 %v1498
        %v1531 = vunpack.c.l.b16 %v1499
        %v1532 = vunpack.c.l.b16 %v1500
        %v1533 = vunpack.c.l.b16 %v1501
        %v1534 = vunpack.c.l.b16 %v1502
        %v1535 = vunpack.c.l.b16 %v1503
        %v1536 = vunpack.c.l.b16 %v1504
        %v1537 = vunpack.c.l.b16 %v1505
        %v1538 = vunpack.c.l.b16 %v1506
        %v1539 = vunpack.c.l.b16 %v1507
        %v1540 = vunpack.c.l.b16 %v1508
        %v1541 = vunpack.c.l.b16 %v1509
        %v1542 = vpack.c.b16 %v1527, %v1526
        %v1543 = vpack.c.b16 %v1529, %v1528
        %v1544 = vpack.c.b16 %v1531, %v1530
        %v1545 = vpack.c.b16 %v1533, %v1532
        %v1546 = vpack.c.b16 %v1535, %v1534
        %v1547 = vpack.c.b16 %v1537, %v1536
        %v1548 = vpack.c.b16 %v1539, %v1538
        %v1549 = vpack.c.b16 %v1541, %v1540
        %1558 = vmatpush.bf16.msra.mxu0 %v1549
        %1559 = vmatpush.bf16.msra.mxu0 %v1548
        %1560 = vmatpush.bf16.msra.mxu0 %v1547
        %1561 = vmatpush.bf16.msra.mxu0 %v1546
        %1562 = vmatpush.bf16.msra.mxu0 %v1545
        %1563 = vmatpush.bf16.msra.mxu0 %v1544
        %1564 = vmatpush.bf16.msra.mxu0 %v1543
        %1565 = vmatpush.bf16.msra.mxu0 %v1542
        %1566 = vmatmul.bf16.gmra.mxu0 %v616
        %v1567 = vpop.f32.mrf.mxu0
        %v1568 = vadd.f32 0.0, %v1567
        %v1569 = vpop.f32.mrf.mxu0
        %1570 = vdwg.mxu0
        %s1571 = scalar_lea.vmem %s523, 192
        %v1572 = vld [vmem:[%s1571] sm:$0xf]
        %v1573 = vld [vmem:[%s1571 + $0x4] sm:$0xf]
        %v1574 = vld [vmem:[%s1571 + $0x8] sm:$0xf]
        %v1575 = vld [vmem:[%s1571 + $0xc] sm:$0xf]
        %v1576 = vld [vmem:[%s1571 + $0x10] sm:$0xf]
        %v1577 = vld [vmem:[%s1571 + $0x14] sm:$0xf]
        %v1578 = vld [vmem:[%s1571 + $0x18] sm:$0xf]
        %v1579 = vld [vmem:[%s1571 + $0x1c] sm:$0xf]
        %v1580 = vld [vmem:[%s1571 + $0x20] sm:$0xf]
        %v1581 = vld [vmem:[%s1571 + $0x24] sm:$0xf]
        %v1582 = vld [vmem:[%s1571 + $0x28] sm:$0xf]
        %v1583 = vld [vmem:[%s1571 + $0x2c] sm:$0xf]
        %v1584 = vld [vmem:[%s1571 + $0x30] sm:$0xf]
        %v1585 = vld [vmem:[%s1571 + $0x34] sm:$0xf]
        %v1586 = vld [vmem:[%s1571 + $0x38] sm:$0xf]
        %v1587 = vld [vmem:[%s1571 + $0x3c] sm:$0xf]
        %v1604 = vunpack.c.l.b16 %v1572
        %v1605 = vunpack.c.l.b16 %v1573
        %v1606 = vunpack.c.l.b16 %v1574
        %v1607 = vunpack.c.l.b16 %v1575
        %v1608 = vunpack.c.l.b16 %v1576
        %v1609 = vunpack.c.l.b16 %v1577
        %v1610 = vunpack.c.l.b16 %v1578
        %v1611 = vunpack.c.l.b16 %v1579
        %v1612 = vunpack.c.l.b16 %v1580
        %v1613 = vunpack.c.l.b16 %v1581
        %v1614 = vunpack.c.l.b16 %v1582
        %v1615 = vunpack.c.l.b16 %v1583
        %v1616 = vunpack.c.l.b16 %v1584
        %v1617 = vunpack.c.l.b16 %v1585
        %v1618 = vunpack.c.l.b16 %v1586
        %v1619 = vunpack.c.l.b16 %v1587
        %v1620 = vpack.c.b16 %v1605, %v1604
        %v1621 = vpack.c.b16 %v1607, %v1606
        %v1622 = vpack.c.b16 %v1609, %v1608
        %v1623 = vpack.c.b16 %v1611, %v1610
        %v1624 = vpack.c.b16 %v1613, %v1612
        %v1625 = vpack.c.b16 %v1615, %v1614
        %v1626 = vpack.c.b16 %v1617, %v1616
        %v1627 = vpack.c.b16 %v1619, %v1618
        %1636 = vmatpush.bf16.msra.mxu0 %v1627
        %1637 = vmatpush.bf16.msra.mxu0 %v1626
        %1638 = vmatpush.bf16.msra.mxu0 %v1625
        %1639 = vmatpush.bf16.msra.mxu0 %v1624
        %1640 = vmatpush.bf16.msra.mxu0 %v1623
        %1641 = vmatpush.bf16.msra.mxu0 %v1622
        %1642 = vmatpush.bf16.msra.mxu0 %v1621
        %1643 = vmatpush.bf16.msra.mxu0 %v1620
        %1644 = vmatmul.bf16.gmra.mxu0 %v616
        %v1645 = vpop.f32.mrf.mxu0
        %v1646 = vadd.f32 0.0, %v1645
        %v1647 = vpop.f32.mrf.mxu0
        %1648 = vdwg.mxu0
        %v1651 = vunpack.c.l.b16 %v1015
        %v1652 = vunpack.c.l.b16 %v1016
        %v1653 = vpack.c.b16 %v1652, %v1651
        %vm1654 = vcmask 261120
        %v1656 = vsel %vm1654, %v1653, 0
        %v1659 = vsel %vm1654, %v1334, 0
        %1661 = vmatpush.bf16.xpose.msra.mxu0 0
        %1662 = vmatpush.bf16.xpose.msra.mxu0 0
        %1663 = vmatpush.bf16.xpose.msra.mxu0 0
        %1664 = vmatpush.bf16.xpose.msra.mxu0 0
        %1665 = vmatpush.bf16.xpose.msra.mxu0 0
        %1666 = vmatpush.bf16.xpose.msra.mxu0 0
        %1667 = vmatpush.bf16.xpose.msra.mxu0 0
        %1668 = vmatpush.bf16.xpose.msra.mxu0 %v1659
        %1669 = vmatmul.bf16.gmra.mxu0 %v1656
        %v1670 = vpop.f32.mrf.mxu0
        %v1671 = vadd.f32 0.0, %v1670
        %v1672 = vpop.f32.mrf.mxu0
        %v1673 = vadd.f32 0.0, %v1672
        %1674 = vdwg.mxu0
        %v1677 = vunpack.c.l.b16 %v1017
        %v1678 = vunpack.c.l.b16 %v1018
        %v1679 = vpack.c.b16 %v1678, %v1677
        %v1681 = vsel %vm1654, %v1679, 0
        %v1684 = vsel %vm1654, %v1335, 0
        %1686 = vmatpush.bf16.xpose.msra.mxu0 0
        %1687 = vmatpush.bf16.xpose.msra.mxu0 0
        %1688 = vmatpush.bf16.xpose.msra.mxu0 0
        %1689 = vmatpush.bf16.xpose.msra.mxu0 0
        %1690 = vmatpush.bf16.xpose.msra.mxu0 0
        %1691 = vmatpush.bf16.xpose.msra.mxu0 0
        %1692 = vmatpush.bf16.xpose.msra.mxu0 0
        %1693 = vmatpush.bf16.xpose.msra.mxu0 %v1684
        %1694 = vmatmul.bf16.gmra.mxu0 %v1681
        %v1695 = vpop.f32.mrf.mxu0
        %v1696 = vadd.f32 0.0, %v1695
        %v1697 = vpop.f32.mrf.mxu0
        %v1698 = vadd.f32 0.0, %v1697
        %1699 = vdwg.mxu0
        %v1702 = vunpack.c.l.b16 %v1019
        %v1703 = vunpack.c.l.b16 %v1020
        %v1704 = vpack.c.b16 %v1703, %v1702
        %v1706 = vsel %vm1654, %v1704, 0
        %v1709 = vsel %vm1654, %v1336, 0
        %1711 = vmatpush.bf16.xpose.msra.mxu0 0
        %1712 = vmatpush.bf16.xpose.msra.mxu0 0
        %1713 = vmatpush.bf16.xpose.msra.mxu0 0
        %1714 = vmatpush.bf16.xpose.msra.mxu0 0
        %1715 = vmatpush.bf16.xpose.msra.mxu0 0
        %1716 = vmatpush.bf16.xpose.msra.mxu0 0
        %1717 = vmatpush.bf16.xpose.msra.mxu0 0
        %1718 = vmatpush.bf16.xpose.msra.mxu0 %v1709
        %1719 = vmatmul.bf16.gmra.mxu0 %v1706
        %v1720 = vpop.f32.mrf.mxu0
        %v1721 = vadd.f32 0.0, %v1720
        %v1722 = vpop.f32.mrf.mxu0
        %v1723 = vadd.f32 0.0, %v1722
        %1724 = vdwg.mxu0
        %v1727 = vunpack.c.l.b16 %v1021
        %v1728 = vunpack.c.l.b16 %v1022
        %v1729 = vpack.c.b16 %v1728, %v1727
        %v1731 = vsel %vm1654, %v1729, 0
        %v1734 = vsel %vm1654, %v1337, 0
        %1736 = vmatpush.bf16.xpose.msra.mxu0 0
        %1737 = vmatpush.bf16.xpose.msra.mxu0 0
        %1738 = vmatpush.bf16.xpose.msra.mxu0 0
        %1739 = vmatpush.bf16.xpose.msra.mxu0 0
        %1740 = vmatpush.bf16.xpose.msra.mxu0 0
        %1741 = vmatpush.bf16.xpose.msra.mxu0 0
        %1742 = vmatpush.bf16.xpose.msra.mxu0 0
        %1743 = vmatpush.bf16.xpose.msra.mxu0 %v1734
        %1744 = vmatmul.bf16.gmra.mxu0 %v1731
        %v1745 = vpop.f32.mrf.mxu0
        %v1746 = vadd.f32 0.0, %v1745
        %v1747 = vpop.f32.mrf.mxu0
        %v1748 = vadd.f32 0.0, %v1747
        %1749 = vdwg.mxu0
        %v1750 = vmul.f32 %v1671, 0.17677669
        %v1751 = vmul.f32 %v1673, 0.17677669
        %v1752 = vmul.f32 %v1696, 0.17677669
        %v1753 = vmul.f32 %v1698, 0.17677669
        %v1754 = vmul.f32 %v1721, 0.17677669
        %v1755 = vmul.f32 %v1723, 0.17677669
        %v1756 = vmul.f32 %v1746, 0.17677669
        %v1757 = vmul.f32 %v1748, 0.17677669
        %v1759 = vperm.slane %v618, 0
        %v1761 = vadd.f32 %v1750, %v1759
        %v1762 = vadd.f32 %v1751, %v1759
        %v1763 = vadd.f32 %v1752, %v1759
        %v1764 = vadd.f32 %v1753, %v1759
        %v1765 = vadd.f32 %v1754, %v1759
        %v1766 = vadd.f32 %v1755, %v1759
        %v1767 = vadd.f32 %v1756, %v1759
        %v1768 = vadd.f32 %v1757, %v1759
        %vm1769 = vcmask 64512
        %v1770 = vsel %vm1769, %v1761, -inf
        %1771 = vmax.xlane.f32.xlu0 %v1770
        %v1772 = vpop.xlane.xlu0 %1771
        %v1773 = vsel %vm1769, %v1762, -inf
        %1774 = vmax.xlane.f32.xlu0 %v1773
        %v1775 = vpop.xlane.xlu0 %1774
        %v1776 = vsel %vm1769, %v1763, -inf
        %1777 = vmax.xlane.f32.xlu0 %v1776
        %v1778 = vpop.xlane.xlu0 %1777
        %v1779 = vsel %vm1769, %v1764, -inf
        %1780 = vmax.xlane.f32.xlu0 %v1779
        %v1781 = vpop.xlane.xlu0 %1780
        %v1782 = vsel %vm1769, %v1765, -inf
        %1783 = vmax.xlane.f32.xlu0 %v1782
        %v1784 = vpop.xlane.xlu0 %1783
        %v1785 = vsel %vm1769, %v1766, -inf
        %1786 = vmax.xlane.f32.xlu0 %v1785
        %v1787 = vpop.xlane.xlu0 %1786
        %v1788 = vsel %vm1769, %v1767, -inf
        %1789 = vmax.xlane.f32.xlu0 %v1788
        %v1790 = vpop.xlane.xlu0 %1789
        %v1791 = vsel %vm1769, %v1768, -inf
        %1792 = vmax.xlane.f32.xlu0 %v1791
        %v1793 = vpop.xlane.xlu0 %1792
        %v1794 = vsub.f32 %v1761, %v1772
        %v1795 = vsub.f32 %v1762, %v1775
        %v1796 = vsub.f32 %v1763, %v1778
        %v1797 = vsub.f32 %v1764, %v1781
        %v1798 = vsub.f32 %v1765, %v1784
        %v1799 = vsub.f32 %v1766, %v1787
        %v1800 = vsub.f32 %v1767, %v1790
        %v1801 = vsub.f32 %v1768, %v1793
        %v1802 = vmul.f32 %v1794, 1.442695
        %v1803 = vpow.pop %v1802
        %v1804 = vmul.f32 %v1795, 1.442695
        %v1805 = vpow.pop %v1804
        %v1806 = vmul.f32 %v1796, 1.442695
        %v1807 = vpow.pop %v1806
        %v1808 = vmul.f32 %v1797, 1.442695
        %v1809 = vpow.pop %v1808
        %v1810 = vmul.f32 %v1798, 1.442695
        %v1811 = vpow.pop %v1810
        %v1812 = vmul.f32 %v1799, 1.442695
        %v1813 = vpow.pop %v1812
        %v1814 = vmul.f32 %v1800, 1.442695
        %v1815 = vpow.pop %v1814
        %v1816 = vmul.f32 %v1801, 1.442695
        %v1817 = vpow.pop %v1816
        %v1818 = vsel %vm1769, %v1803, 0.0
        %1819 = vadd.xlane.f32.xlu0 %v1818
        %v1820 = vpop.xlane.xlu0 %1819
        %v1821 = vsel %vm1769, %v1805, 0.0
        %1822 = vadd.xlane.f32.xlu0 %v1821
        %v1823 = vpop.xlane.xlu0 %1822
        %v1824 = vsel %vm1769, %v1807, 0.0
        %1825 = vadd.xlane.f32.xlu0 %v1824
        %v1826 = vpop.xlane.xlu0 %1825
        %v1827 = vsel %vm1769, %v1809, 0.0
        %1828 = vadd.xlane.f32.xlu0 %v1827
        %v1829 = vpop.xlane.xlu0 %1828
        %v1830 = vsel %vm1769, %v1811, 0.0
        %1831 = vadd.xlane.f32.xlu0 %v1830
        %v1832 = vpop.xlane.xlu0 %1831
        %v1833 = vsel %vm1769, %v1813, 0.0
        %1834 = vadd.xlane.f32.xlu0 %v1833
        %v1835 = vpop.xlane.xlu0 %1834
        %v1836 = vsel %vm1769, %v1815, 0.0
        %1837 = vadd.xlane.f32.xlu0 %v1836
        %v1838 = vpop.xlane.xlu0 %1837
        %v1839 = vsel %vm1769, %v1817, 0.0
        %1840 = vadd.xlane.f32.xlu0 %v1839
        %v1841 = vpop.xlane.xlu0 %1840
        %v1842 = vrcp.pop %v1820
        %v1843 = vrcp.pop %v1823
        %v1844 = vrcp.pop %v1826
        %v1845 = vrcp.pop %v1829
        %v1846 = vrcp.pop %v1832
        %v1847 = vrcp.pop %v1835
        %v1848 = vrcp.pop %v1838
        %v1849 = vrcp.pop %v1841
        %v1850 = vmul.f32 %v1803, %v1842
        %v1851 = vmul.f32 %v1805, %v1843
        %v1852 = vmul.f32 %v1807, %v1844
        %v1853 = vmul.f32 %v1809, %v1845
        %v1854 = vmul.f32 %v1811, %v1846
        %v1855 = vmul.f32 %v1813, %v1847
        %v1856 = vmul.f32 %v1815, %v1848
        %v1857 = vmul.f32 %v1817, %v1849
        %v1859 = vsel %vm1769, %v1850, 0
        %v1862 = vsel %vm1769, %v1851, 0
        %1864 = vmatpush.msra.mxu0 0.0
        %1865 = vmatpush.msra.mxu0 0.0
        %1866 = vmatpush.msra.mxu0 0.0
        %1867 = vmatpush.msra.mxu0 0.0
        %1868 = vmatpush.msra.mxu0 0.0
        %1869 = vmatpush.msra.mxu0 0.0
        %1870 = vmatpush.msra.mxu0 0.0
        %1871 = vmatpush.msra.mxu0 0.0
        %1872 = vmatpush.msra.mxu0 0.0
        %1873 = vmatpush.msra.mxu0 0.0
        %1874 = vmatpush.msra.mxu0 0.0
        %1875 = vmatpush.msra.mxu0 0.0
        %1876 = vmatpush.msra.mxu0 0.0
        %1877 = vmatpush.msra.mxu0 0.0
        %1878 = vmatpush.msra.mxu0 0.0
        %1879 = vmatpush.msra.mxu0 %v1412
        %1880 = vmatmul.f32.gmra.mxu0 %v1859
        %v1881 = vpop.f32.mrf.mxu0
        %v1882 = vadd.f32 0.0, %v1881
        %1883 = vmatmul.f32.gmra.mxu0 %v1862
        %v1884 = vpop.f32.mrf.mxu0
        %v1885 = vadd.f32 0.0, %v1884
        %1886 = vdwg.mxu0
        %v1888 = vsel %vm1769, %v1852, 0
        %v1891 = vsel %vm1769, %v1853, 0
        %1893 = vmatpush.msra.mxu0 0.0
        %1894 = vmatpush.msra.mxu0 0.0
        %1895 = vmatpush.msra.mxu0 0.0
        %1896 = vmatpush.msra.mxu0 0.0
        %1897 = vmatpush.msra.mxu0 0.0
        %1898 = vmatpush.msra.mxu0 0.0
        %1899 = vmatpush.msra.mxu0 0.0
        %1900 = vmatpush.msra.mxu0 0.0
        %1901 = vmatpush.msra.mxu0 0.0
        %1902 = vmatpush.msra.mxu0 0.0
        %1903 = vmatpush.msra.mxu0 0.0
        %1904 = vmatpush.msra.mxu0 0.0
        %1905 = vmatpush.msra.mxu0 0.0
        %1906 = vmatpush.msra.mxu0 0.0
        %1907 = vmatpush.msra.mxu0 0.0
        %1908 = vmatpush.msra.mxu0 %v1490
        %1909 = vmatmul.f32.gmra.mxu0 %v1888
        %v1910 = vpop.f32.mrf.mxu0
        %v1911 = vadd.f32 0.0, %v1910
        %1912 = vmatmul.f32.gmra.mxu0 %v1891
        %v1913 = vpop.f32.mrf.mxu0
        %v1914 = vadd.f32 0.0, %v1913
        %1915 = vdwg.mxu0
        %v1917 = vsel %vm1769, %v1854, 0
        %v1920 = vsel %vm1769, %v1855, 0
        %1922 = vmatpush.msra.mxu0 0.0
        %1923 = vmatpush.msra.mxu0 0.0
        %1924 = vmatpush.msra.mxu0 0.0
        %1925 = vmatpush.msra.mxu0 0.0
        %1926 = vmatpush.msra.mxu0 0.0
        %1927 = vmatpush.msra.mxu0 0.0
        %1928 = vmatpush.msra.mxu0 0.0
        %1929 = vmatpush.msra.mxu0 0.0
        %1930 = vmatpush.msra.mxu0 0.0
        %1931 = vmatpush.msra.mxu0 0.0
        %1932 = vmatpush.msra.mxu0 0.0
        %1933 = vmatpush.msra.mxu0 0.0
        %1934 = vmatpush.msra.mxu0 0.0
        %1935 = vmatpush.msra.mxu0 0.0
        %1936 = vmatpush.msra.mxu0 0.0
        %1937 = vmatpush.msra.mxu0 %v1568
        %1938 = vmatmul.f32.gmra.mxu0 %v1917
        %v1939 = vpop.f32.mrf.mxu0
        %v1940 = vadd.f32 0.0, %v1939
        %1941 = vmatmul.f32.gmra.mxu0 %v1920
        %v1942 = vpop.f32.mrf.mxu0
        %v1943 = vadd.f32 0.0, %v1942
        %1944 = vdwg.mxu0
        %v1946 = vsel %vm1769, %v1856, 0
        %v1949 = vsel %vm1769, %v1857, 0
        %1951 = vmatpush.msra.mxu0 0.0
        %1952 = vmatpush.msra.mxu0 0.0
        %1953 = vmatpush.msra.mxu0 0.0
        %1954 = vmatpush.msra.mxu0 0.0
        %1955 = vmatpush.msra.mxu0 0.0
        %1956 = vmatpush.msra.mxu0 0.0
        %1957 = vmatpush.msra.mxu0 0.0
        %1958 = vmatpush.msra.mxu0 0.0
        %1959 = vmatpush.msra.mxu0 0.0
        %1960 = vmatpush.msra.mxu0 0.0
        %1961 = vmatpush.msra.mxu0 0.0
        %1962 = vmatpush.msra.mxu0 0.0
        %1963 = vmatpush.msra.mxu0 0.0
        %1964 = vmatpush.msra.mxu0 0.0
        %1965 = vmatpush.msra.mxu0 0.0
        %1966 = vmatpush.msra.mxu0 %v1646
        %1967 = vmatmul.f32.gmra.mxu0 %v1946
        %v1968 = vpop.f32.mrf.mxu0
        %v1969 = vadd.f32 0.0, %v1968
        %1970 = vmatmul.f32.gmra.mxu0 %v1949
        %v1971 = vpop.f32.mrf.mxu0
        %v1972 = vadd.f32 0.0, %v1971
        %1973 = vdwg.mxu0
        %v1974 = vmul.f32 %v1412, %v1412
        %v1975 = vmul.f32 %v1490, %v1490
        %v1976 = vmul.f32 %v1568, %v1568
        %v1977 = vmul.f32 %v1646, %v1646
        %1978 = vmatpush.msra.mxu0 0.0
        %1979 = vmatpush.msra.mxu0 0.0
        %1980 = vmatpush.msra.mxu0 0.0
        %1981 = vmatpush.msra.mxu0 0.0
        %1982 = vmatpush.msra.mxu0 0.0
        %1983 = vmatpush.msra.mxu0 0.0
        %1984 = vmatpush.msra.mxu0 0.0
        %1985 = vmatpush.msra.mxu0 0.0
        %1986 = vmatpush.msra.mxu0 0.0
        %1987 = vmatpush.msra.mxu0 0.0
        %1988 = vmatpush.msra.mxu0 0.0
        %1989 = vmatpush.msra.mxu0 0.0
        %1990 = vmatpush.msra.mxu0 0.0
        %1991 = vmatpush.msra.mxu0 0.0
        %1992 = vmatpush.msra.mxu0 0.0
        %1993 = vmatpush.msra.mxu0 %v1974
        %1994 = vmatmul.f32.gmra.mxu0 %v1859
        %v1995 = vpop.f32.mrf.mxu0
        %v1996 = vadd.f32 0.0, %v1995
        %1997 = vmatmul.f32.gmra.mxu0 %v1862
        %v1998 = vpop.f32.mrf.mxu0
        %v1999 = vadd.f32 0.0, %v1998
        %2000 = vdwg.mxu0
        %2001 = vmatpush.msra.mxu0 0.0
        %2002 = vmatpush.msra.mxu0 0.0
        %2003 = vmatpush.msra.mxu0 0.0
        %2004 = vmatpush.msra.mxu0 0.0
        %2005 = vmatpush.msra.mxu0 0.0
        %2006 = vmatpush.msra.mxu0 0.0
        %2007 = vmatpush.msra.mxu0 0.0
        %2008 = vmatpush.msra.mxu0 0.0
        %2009 = vmatpush.msra.mxu0 0.0
        %2010 = vmatpush.msra.mxu0 0.0
        %2011 = vmatpush.msra.mxu0 0.0
        %2012 = vmatpush.msra.mxu0 0.0
        %2013 = vmatpush.msra.mxu0 0.0
        %2014 = vmatpush.msra.mxu0 0.0
        %2015 = vmatpush.msra.mxu0 0.0
        %2016 = vmatpush.msra.mxu0 %v1975
        %2017 = vmatmul.f32.gmra.mxu0 %v1888
        %v2018 = vpop.f32.mrf.mxu0
        %v2019 = vadd.f32 0.0, %v2018
        %2020 = vmatmul.f32.gmra.mxu0 %v1891
        %v2021 = vpop.f32.mrf.mxu0
        %v2022 = vadd.f32 0.0, %v2021
        %2023 = vdwg.mxu0
        %2024 = vmatpush.msra.mxu0 0.0
        %2025 = vmatpush.msra.mxu0 0.0
        %2026 = vmatpush.msra.mxu0 0.0
        %2027 = vmatpush.msra.mxu0 0.0
        %2028 = vmatpush.msra.mxu0 0.0
        %2029 = vmatpush.msra.mxu0 0.0
        %2030 = vmatpush.msra.mxu0 0.0
        %2031 = vmatpush.msra.mxu0 0.0
        %2032 = vmatpush.msra.mxu0 0.0
        %2033 = vmatpush.msra.mxu0 0.0
        %2034 = vmatpush.msra.mxu0 0.0
        %2035 = vmatpush.msra.mxu0 0.0
        %2036 = vmatpush.msra.mxu0 0.0
        %2037 = vmatpush.msra.mxu0 0.0
        %2038 = vmatpush.msra.mxu0 0.0
        %2039 = vmatpush.msra.mxu0 %v1976
        %2040 = vmatmul.f32.gmra.mxu0 %v1917
        %v2041 = vpop.f32.mrf.mxu0
        %v2042 = vadd.f32 0.0, %v2041
        %2043 = vmatmul.f32.gmra.mxu0 %v1920
        %v2044 = vpop.f32.mrf.mxu0
        %v2045 = vadd.f32 0.0, %v2044
        %2046 = vdwg.mxu0
        %2047 = vmatpush.msra.mxu0 0.0
        %2048 = vmatpush.msra.mxu0 0.0
        %2049 = vmatpush.msra.mxu0 0.0
        %2050 = vmatpush.msra.mxu0 0.0
        %2051 = vmatpush.msra.mxu0 0.0
        %2052 = vmatpush.msra.mxu0 0.0
        %2053 = vmatpush.msra.mxu0 0.0
        %2054 = vmatpush.msra.mxu0 0.0
        %2055 = vmatpush.msra.mxu0 0.0
        %2056 = vmatpush.msra.mxu0 0.0
        %2057 = vmatpush.msra.mxu0 0.0
        %2058 = vmatpush.msra.mxu0 0.0
        %2059 = vmatpush.msra.mxu0 0.0
        %2060 = vmatpush.msra.mxu0 0.0
        %2061 = vmatpush.msra.mxu0 0.0
        %2062 = vmatpush.msra.mxu0 %v1977
        %2063 = vmatmul.f32.gmra.mxu0 %v1946
        %v2064 = vpop.f32.mrf.mxu0
        %v2065 = vadd.f32 0.0, %v2064
        %2066 = vmatmul.f32.gmra.mxu0 %v1949
        %v2067 = vpop.f32.mrf.mxu0
        %v2068 = vadd.f32 0.0, %v2067
        %2069 = vdwg.mxu0
        %2072 = vrot.lane.b32.xlu0 %v1911, 32
        %v2073 = vpop.permute.xlu0 %2072
        %2074 = vrot.lane.b32.xlu0 %v1914, 32
        %v2075 = vpop.permute.xlu0 %2074
        %2080 = vrot.lane.b32.xlu0 %v1940, 64
        %v2081 = vpop.permute.xlu0 %2080
        %2082 = vrot.lane.b32.xlu0 %v1943, 64
        %v2083 = vpop.permute.xlu0 %2082
        %2088 = vrot.lane.b32.xlu0 %v1969, 96
        %v2089 = vpop.permute.xlu0 %2088
        %2090 = vrot.lane.b32.xlu0 %v1972, 96
        %v2091 = vpop.permute.xlu0 %2090
        %v2094 = vsel %vm1654, %v1882, %v2073
        %v2095 = vsel %vm1654, %v1885, %v2075
        %vm2096 = vcmask 523264
        %v2097 = vsel %vm2096, %v2094, %v2081
        %v2098 = vsel %vm2096, %v2095, %v2083
        %vm2099 = vcmask 785408
        %v2100 = vsel %vm2099, %v2097, %v2089
        %v2101 = vsel %vm2099, %v2098, %v2091
        %2104 = vrot.lane.b32.xlu0 %v2019, 32
        %v2105 = vpop.permute.xlu0 %2104
        %2106 = vrot.lane.b32.xlu0 %v2022, 32
        %v2107 = vpop.permute.xlu0 %2106
        %2112 = vrot.lane.b32.xlu0 %v2042, 64
        %v2113 = vpop.permute.xlu0 %2112
        %2114 = vrot.lane.b32.xlu0 %v2045, 64
        %v2115 = vpop.permute.xlu0 %2114
        %2120 = vrot.lane.b32.xlu0 %v2065, 96
        %v2121 = vpop.permute.xlu0 %2120
        %2122 = vrot.lane.b32.xlu0 %v2068, 96
        %v2123 = vpop.permute.xlu0 %2122
        %v2126 = vsel %vm1654, %v1996, %v2105
        %v2127 = vsel %vm1654, %v1999, %v2107
        %v2128 = vsel %vm2096, %v2126, %v2113
        %v2129 = vsel %vm2096, %v2127, %v2115
        %v2130 = vsel %vm2099, %v2128, %v2121
        %v2131 = vsel %vm2099, %v2129, %v2123
        %v2132 = vmul.f32 %v2100, %v2100
        %v2133 = vmul.f32 %v2101, %v2101
        %v2134 = vsub.f32 %v2130, %v2132
        %v2135 = vsub.f32 %v2131, %v2133
        %v2136 = vmax.f32 %v2134, 0.0
        %v2137 = vmax.f32 %v2135, 0.0
        %v2138 = vadd.f32 %v2136, 1e-05
        %v2139 = vadd.f32 %v2137, 1e-05
        %v2140 = vrsqrt.pop %v2138
        %v2141 = vmul.f32 %v2140, %v2138
        %v2142 = vmul.f32 %v2141, %v2140
        %v2143 = vmul.f32 0.5, %v2142
        %v2144 = vsub.f32 1.5, %v2143
        %v2145 = vmul.f32 %v2140, %v2144
        %v2146 = vmul.f32 %v2138, %v2145
        %vm2147 = vcmp.eq.f32.partialorder %v2138, inf
        %v2148 = vsel %vm2147, %v2138, %v2146
        %vm2149 = vcmp.eq.f32.partialorder %v2138, 0.0
        %v2150 = vand.u32 %v2138, 2147483648
        %v2151 = vsel %vm2149, %v2150, %v2148
        %v2152 = vrsqrt.pop %v2139
        %v2153 = vmul.f32 %v2152, %v2139
        %v2154 = vmul.f32 %v2153, %v2152
        %v2155 = vmul.f32 0.5, %v2154
        %v2156 = vsub.f32 1.5, %v2155
        %v2157 = vmul.f32 %v2152, %v2156
        %v2158 = vmul.f32 %v2139, %v2157
        %vm2159 = vcmp.eq.f32.partialorder %v2139, inf
        %v2160 = vsel %vm2159, %v2139, %v2158
        %vm2161 = vcmp.eq.f32.partialorder %v2139, 0.0
        %v2162 = vand.u32 %v2139, 2147483648
        %v2163 = vsel %vm2161, %v2162, %v2160
        %v2164 = vmul.f32 %v2151, %v697
        %v2165 = vmul.f32 %v2163, %v698
        %v2166 = vadd.f32 %v2164, %v2100
        %v2167 = vadd.f32 %v2165, %v2101
        %v2168 = vmul.f32 %v2166, %v647
        %v2169 = vmul.f32 %v2167, %v652
        %v2170 = vlaneseq
        %v2171 = vshrl.u32 %v2170, 7
        %v2172 = vadd.s32 %v2171, 8
        %vm2173 = vcmp.gt.s32.totalorder %v2171, 0
        %vm2174 = vcmp.gt.s32.totalorder %v2172, 0
        %v2175 = vrot.slane %v2168, 7
        %v2176 = vrot.slane %v2169, 7
        %vm2177 = vcmp.lt.s32.totalorder %v2171, 1
        %v2178 = vsel %vm2177, %v2175, %v2176
        %v2179 = vsel %vm2177, %v2176, %v2175
        %v2180 = vsel %vm2173, 1, 0
        %v2181 = vsel %vm2174, 1, 0
        %vm2182 = vcmp.eq.s32.totalorder %v2180, 1
        %vm2183 = vcmp.eq.s32.totalorder %v2181, 1
        %v2184 = vsel %vm2182, %v2179, 0.0
        %v2185 = vsel %vm2183, %v2178, 0.0
        %v2186 = vpack.c.bf16 %v2184, %v2184
        %v2187 = vpack.c.bf16 %v2185, %v2185
        %vm2188 = vcmp.lt.s32.totalorder %v2171, 15
        %vm2189 = vcmp.lt.s32.totalorder %v2172, 15
        %v2190 = vrot.slane %v2168, 1
        %v2191 = vrot.slane %v2169, 1
        %vm2192 = vcmp.lt.s32.totalorder %v2171, 7
        %v2193 = vsel %vm2192, %v2190, %v2191
        %v2194 = vsel %vm2192, %v2191, %v2190
        %v2195 = vsel %vm2188, 1, 0
        %v2196 = vsel %vm2189, 1, 0
        %vm2197 = vcmp.eq.s32.totalorder %v2195, 1
        %vm2198 = vcmp.eq.s32.totalorder %v2196, 1
        %v2199 = vsel %vm2197, %v2193, 0.0
        %v2200 = vsel %vm2198, %v2194, 0.0
        %v2201 = vpack.c.bf16 %v2199, %v2199
        %v2202 = vpack.c.bf16 %v2200, %v2200
        %v2203 = vpack.c.bf16 %v2168, %v2168
        %v2204 = vpack.c.bf16 %v2169, %v2169
        %v2207 = vunpack.c.l.b16 %v2186
        %v2208 = vunpack.c.l.b16 %v2187
        %v2209 = vpack.c.b16 %v2208, %v2207
        %v2213 = vunpack.c.l.b16 %v2203
        %v2214 = vunpack.c.l.b16 %v2204
        %v2215 = vpack.c.b16 %v2214, %v2213
        %v2219 = vunpack.c.l.b16 %v2201
        %v2220 = vunpack.c.l.b16 %v2202
        %v2221 = vpack.c.b16 %v2220, %v2219
        %v2223 = vld [vmem:[%s528] sm:$0xf]
        %v2224 = vld [vmem:[%s528 + $0x4] sm:$0xf]
        %v2225 = vld [vmem:[%s528 + $0x8] sm:$0xf]
        %v2226 = vld [vmem:[%s528 + $0xc] sm:$0xf]
        %v2227 = vld [vmem:[%s528 + $0x10] sm:$0xf]
        %v2228 = vld [vmem:[%s528 + $0x14] sm:$0xf]
        %v2229 = vld [vmem:[%s528 + $0x18] sm:$0xf]
        %v2230 = vld [vmem:[%s528 + $0x1c] sm:$0xf]
        %v2231 = vld [vmem:[%s528 + $0x20] sm:$0xf]
        %v2232 = vld [vmem:[%s528 + $0x24] sm:$0xf]
        %v2233 = vld [vmem:[%s528 + $0x28] sm:$0xf]
        %v2234 = vld [vmem:[%s528 + $0x2c] sm:$0xf]
        %v2235 = vld [vmem:[%s528 + $0x30] sm:$0xf]
        %v2236 = vld [vmem:[%s528 + $0x34] sm:$0xf]
        %v2237 = vld [vmem:[%s528 + $0x38] sm:$0xf]
        %v2238 = vld [vmem:[%s528 + $0x3c] sm:$0xf]
        %v2239 = vld [vmem:[%s528 + $0x40] sm:$0xf]
        %v2240 = vld [vmem:[%s528 + $0x44] sm:$0xf]
        %v2241 = vld [vmem:[%s528 + $0x48] sm:$0xf]
        %v2242 = vld [vmem:[%s528 + $0x4c] sm:$0xf]
        %v2243 = vld [vmem:[%s528 + $0x50] sm:$0xf]
        %v2244 = vld [vmem:[%s528 + $0x54] sm:$0xf]
        %v2245 = vld [vmem:[%s528 + $0x58] sm:$0xf]
        %v2246 = vld [vmem:[%s528 + $0x5c] sm:$0xf]
        %v2247 = vld [vmem:[%s528 + $0x60] sm:$0xf]
        %v2248 = vld [vmem:[%s528 + $0x64] sm:$0xf]
        %v2249 = vld [vmem:[%s528 + $0x68] sm:$0xf]
        %v2250 = vld [vmem:[%s528 + $0x6c] sm:$0xf]
        %v2251 = vld [vmem:[%s528 + $0x70] sm:$0xf]
        %v2252 = vld [vmem:[%s528 + $0x74] sm:$0xf]
        %v2253 = vld [vmem:[%s528 + $0x78] sm:$0xf]
        %v2254 = vld [vmem:[%s528 + $0x7c] sm:$0xf]
        %v2255 = vld [vmem:[%s528 + $0x80] sm:$0xf]
        %v2256 = vld [vmem:[%s528 + $0x84] sm:$0xf]
        %v2257 = vld [vmem:[%s528 + $0x88] sm:$0xf]
        %v2258 = vld [vmem:[%s528 + $0x8c] sm:$0xf]
        %v2259 = vld [vmem:[%s528 + $0x90] sm:$0xf]
        %v2260 = vld [vmem:[%s528 + $0x94] sm:$0xf]
        %v2261 = vld [vmem:[%s528 + $0x98] sm:$0xf]
        %v2262 = vld [vmem:[%s528 + $0x9c] sm:$0xf]
        %v2263 = vld [vmem:[%s528 + $0xa0] sm:$0xf]
        %v2264 = vld [vmem:[%s528 + $0xa4] sm:$0xf]
        %v2265 = vld [vmem:[%s528 + $0xa8] sm:$0xf]
        %v2266 = vld [vmem:[%s528 + $0xac] sm:$0xf]
        %v2267 = vld [vmem:[%s528 + $0xb0] sm:$0xf]
        %v2268 = vld [vmem:[%s528 + $0xb4] sm:$0xf]
        %v2269 = vld [vmem:[%s528 + $0xb8] sm:$0xf]
        %v2270 = vld [vmem:[%s528 + $0xbc] sm:$0xf]
        %v2271 = vld [vmem:[%s531] sm:$0x1]
        %v2273 = vperm.slane %v2271, 0
        %v2323 = vunpack.c.l.b16 %v2223
        %v2324 = vunpack.c.l.b16 %v2224
        %v2325 = vunpack.c.l.b16 %v2225
        %v2326 = vunpack.c.l.b16 %v2226
        %v2327 = vunpack.c.l.b16 %v2227
        %v2328 = vunpack.c.l.b16 %v2228
        %v2329 = vunpack.c.l.b16 %v2229
        %v2330 = vunpack.c.l.b16 %v2230
        %v2331 = vunpack.c.l.b16 %v2231
        %v2332 = vunpack.c.l.b16 %v2232
        %v2333 = vunpack.c.l.b16 %v2233
        %v2334 = vunpack.c.l.b16 %v2234
        %v2335 = vunpack.c.l.b16 %v2235
        %v2336 = vunpack.c.l.b16 %v2236
        %v2337 = vunpack.c.l.b16 %v2237
        %v2338 = vunpack.c.l.b16 %v2238
        %v2339 = vunpack.c.l.b16 %v2239
        %v2340 = vunpack.c.l.b16 %v2240
        %v2341 = vunpack.c.l.b16 %v2241
        %v2342 = vunpack.c.l.b16 %v2242
        %v2343 = vunpack.c.l.b16 %v2243
        %v2344 = vunpack.c.l.b16 %v2244
        %v2345 = vunpack.c.l.b16 %v2245
        %v2346 = vunpack.c.l.b16 %v2246
        %v2347 = vunpack.c.l.b16 %v2247
        %v2348 = vunpack.c.l.b16 %v2248
        %v2349 = vunpack.c.l.b16 %v2249
        %v2350 = vunpack.c.l.b16 %v2250
        %v2351 = vunpack.c.l.b16 %v2251
        %v2352 = vunpack.c.l.b16 %v2252
        %v2353 = vunpack.c.l.b16 %v2253
        %v2354 = vunpack.c.l.b16 %v2254
        %v2355 = vunpack.c.l.b16 %v2255
        %v2356 = vunpack.c.l.b16 %v2256
        %v2357 = vunpack.c.l.b16 %v2257
        %v2358 = vunpack.c.l.b16 %v2258
        %v2359 = vunpack.c.l.b16 %v2259
        %v2360 = vunpack.c.l.b16 %v2260
        %v2361 = vunpack.c.l.b16 %v2261
        %v2362 = vunpack.c.l.b16 %v2262
        %v2363 = vunpack.c.l.b16 %v2263
        %v2364 = vunpack.c.l.b16 %v2264
        %v2365 = vunpack.c.l.b16 %v2265
        %v2366 = vunpack.c.l.b16 %v2266
        %v2367 = vunpack.c.l.b16 %v2267
        %v2368 = vunpack.c.l.b16 %v2268
        %v2369 = vunpack.c.l.b16 %v2269
        %v2370 = vunpack.c.l.b16 %v2270
        %v2371 = vpack.c.b16 %v2324, %v2323
        %v2372 = vpack.c.b16 %v2326, %v2325
        %v2373 = vpack.c.b16 %v2328, %v2327
        %v2374 = vpack.c.b16 %v2330, %v2329
        %v2375 = vpack.c.b16 %v2332, %v2331
        %v2376 = vpack.c.b16 %v2334, %v2333
        %v2377 = vpack.c.b16 %v2336, %v2335
        %v2378 = vpack.c.b16 %v2338, %v2337
        %v2379 = vpack.c.b16 %v2340, %v2339
        %v2380 = vpack.c.b16 %v2342, %v2341
        %v2381 = vpack.c.b16 %v2344, %v2343
        %v2382 = vpack.c.b16 %v2346, %v2345
        %v2383 = vpack.c.b16 %v2348, %v2347
        %v2384 = vpack.c.b16 %v2350, %v2349
        %v2385 = vpack.c.b16 %v2352, %v2351
        %v2386 = vpack.c.b16 %v2354, %v2353
        %v2387 = vpack.c.b16 %v2356, %v2355
        %v2388 = vpack.c.b16 %v2358, %v2357
        %v2389 = vpack.c.b16 %v2360, %v2359
        %v2390 = vpack.c.b16 %v2362, %v2361
        %v2391 = vpack.c.b16 %v2364, %v2363
        %v2392 = vpack.c.b16 %v2366, %v2365
        %v2393 = vpack.c.b16 %v2368, %v2367
        %v2394 = vpack.c.b16 %v2370, %v2369
        %2419 = vmatpush.bf16.msra.mxu0 %v2378
        %2420 = vmatpush.bf16.msra.mxu0 %v2377
        %2421 = vmatpush.bf16.msra.mxu0 %v2376
        %2422 = vmatpush.bf16.msra.mxu0 %v2375
        %2423 = vmatpush.bf16.msra.mxu0 %v2374
        %2424 = vmatpush.bf16.msra.mxu0 %v2373
        %2425 = vmatpush.bf16.msra.mxu0 %v2372
        %2426 = vmatpush.bf16.msra.mxu0 %v2371
        %2427 = vmatmul.bf16.gmra.mxu0 %v2209
        %v2428 = vpop.f32.mrf.mxu0
        %v2429 = vadd.f32 %v2273, %v2428
        %v2430 = vpop.f32.mrf.mxu0
        %v2431 = vadd.f32 %v2273, %v2430
        %2432 = vdwg.mxu0
        %2433 = vmatpush.bf16.msra.mxu0 %v2386
        %2434 = vmatpush.bf16.msra.mxu0 %v2385
        %2435 = vmatpush.bf16.msra.mxu0 %v2384
        %2436 = vmatpush.bf16.msra.mxu0 %v2383
        %2437 = vmatpush.bf16.msra.mxu0 %v2382
        %2438 = vmatpush.bf16.msra.mxu0 %v2381
        %2439 = vmatpush.bf16.msra.mxu0 %v2380
        %2440 = vmatpush.bf16.msra.mxu0 %v2379
        %2441 = vmatmul.bf16.gmra.mxu0 %v2215
        %v2442 = vpop.f32.mrf.mxu0
        %v2443 = vadd.f32 %v2429, %v2442
        %v2444 = vpop.f32.mrf.mxu0
        %v2445 = vadd.f32 %v2431, %v2444
        %2446 = vdwg.mxu0
        %2447 = vmatpush.bf16.msra.mxu0 %v2394
        %2448 = vmatpush.bf16.msra.mxu0 %v2393
        %2449 = vmatpush.bf16.msra.mxu0 %v2392
        %2450 = vmatpush.bf16.msra.mxu0 %v2391
        %2451 = vmatpush.bf16.msra.mxu0 %v2390
        %2452 = vmatpush.bf16.msra.mxu0 %v2389
        %2453 = vmatpush.bf16.msra.mxu0 %v2388
        %2454 = vmatpush.bf16.msra.mxu0 %v2387
        %2455 = vmatmul.bf16.gmra.mxu0 %v2221
        %v2456 = vpop.f32.mrf.mxu0
        %v2457 = vadd.f32 %v2443, %v2456
        %v2458 = vpop.f32.mrf.mxu0
        %v2459 = vadd.f32 %v2445, %v2458
        %2460 = vdwg.mxu0
        %2461 = vst [vmem:[#allocation2] sm:$0xff] %v2457
        %2462 = vst [vmem:[#allocation2 + $0x8] sm:$0xff] %v2459
        %p2463 = scmp.eq.s32.totalorder %s29, 1
        // Predicated region
        $region65: #{tpu_custom_call.1} parent=59 // pred_check
          %p2464 = pneg %p2463
        $region66: #{tpu_custom_call.1} parent=59 // pred_check_branch
          %2466 = sbr.rel (%p2464) target = $region68
        $region67: #{tpu_custom_call.1} parent=59 // pred_region
          %v2467 = vmul.f32 %v2457, %v647
          %v2468 = vmul.f32 %v2459, %v652
          %2469 = vst [vmem:[%s487] sm:$0xff] %v2467
          %2470 = vst [vmem:[%s487 + $0x8] sm:$0xff] %v2468
        $region68: #{tpu_custom_call.1} parent=59 // pred_fallthru
          _
        %s2471 = sand.u32 %s304, 1
        %s2472 = scalar_lea.sflag [#allocation4], %s2471
        %s2473 = sand.u32 %s304, 1
        %s2474 = smul.addr %s2473, 16
        %s2475 = scalar_lea.vmem [#allocation3], %s2474
        // Predicated region
        $region69: #{tpu_custom_call.1} parent=59 // pred_check
          %p2476 = pneg %p314
        $region70: #{tpu_custom_call.1} parent=59 // pred_check_branch
          %2478 = sbr.rel (%p2476) target = $region72
        $region71: #{tpu_custom_call.1} parent=59 // pred_region
          %2480 = vsyncadd %s2472, 0
          %s2481 = smul.addr %s28, 2
          %s2482 = smul.addr %s2481, 8
          %s2483 = scalar_lea.hbm %s10, %s2482
          %s2484 = sshll.u32 %s2475, 4
          %s2485 = int_to_ptr.vmem [resolvable:$true] %s2484
          %s2486 = sshll.u32 %s2483, 4
          %s2487 = int_to_ptr.hbm [resolvable:$true] %s2486
          %2492 = dma.vmem_to_hbm [thread:$0]  %s2485, 256, %s2487, %s2472, 128, 128, 8
        $region72: #{tpu_custom_call.1} parent=59 // pred_fallthru
          _
      $region60: #{tpu_custom_call.1} parent=5 // pred_fallthru
        _
      %p2493 = scmp.le.s32.totalorder 2, %s19
      // Predicated region
      $region73: #{tpu_custom_call.1} parent=5 // pred_check
        %p2494 = pneg %p2493
      $region74: #{tpu_custom_call.1} parent=5 // pred_check_branch
        %2496 = sbr.rel (%p2494) target = $region76
      $region75: #{tpu_custom_call.1} parent=5 // pred_region
        %s2497 = ssub.s32 %s19, 2
        // Predicated region
        $region77: #{tpu_custom_call.1} parent=75 // pred_check
          %p2498 = pneg %p320
        $region78: #{tpu_custom_call.1} parent=75 // pred_check_branch
          %2500 = sbr.rel (%p2498) target = $region80
        $region79: #{tpu_custom_call.1} parent=75 // pred_region
          %s2501 = sand.u32 %s305, 1
          %s2502 = scalar_lea.sflag [#allocation4], %s2501
          %s2503 = sand.u32 %s305, 1
          %s2504 = smul.addr %s2503, 16
          %s2505 = scalar_lea.vmem [#allocation3], %s2504
          %2507 = dma.done %s2502, 256
        $region80: #{tpu_custom_call.1} parent=75 // pred_fallthru
          _
      $region76: #{tpu_custom_call.1} parent=5 // pred_fallthru
        _
    $region6: #{tpu_custom_call.1} parent=1 // loop_footer
      %s23 = sadd.s32 1, %s19
    $region7: #{tpu_custom_call.1} parent=1 // loop_footer_branch
      %18 = sbr.rel target = $region3
    $region8: #{tpu_custom_call.1} parent=1 // loop_exit
      _
    %2508 = vsyncpa [#allocation4], 1
    %s2509 = scalar_lea.sflag [#allocation4], 1
    %2510 = vsyncpa %s2509, 1

</llo_original>
